<compile_context>
chip_gen: v6e
topology: v6e:2x2x1
jax: 0.10.0
libtpu: 0.0.40
codegen_flags: <defaults>
</compile_context>

<pallas_src>
import functools

import jax
import jax.numpy as jnp
from jax.experimental import pallas as pl
from jax.experimental.pallas import tpu as pltpu

N_PAD = 128  # lane-dense padding for the final logits / fc2 weights
KPAD = 128   # per-tap K padding for conv2/conv3 slabs (lane-tile aligned)


# ---------------------------------------------------------------------------
# Fused LeNet-5 kernel: one grid step == TB images, everything in VMEM.
# ---------------------------------------------------------------------------
def _lenet5_kernel(x_ref, t1_ref, b1_ref, p1_ref, t2_ref, b2_ref, p2_ref,
                   t3_ref, b3_ref, wf1_ref, bf1_ref, wf2_ref, bf2_ref,
                   out_ref, slab2_ref, slab3_ref, *, tb):
    f32, bf16 = jnp.float32, jnp.bfloat16

    # ---- conv1 + bias + tanh : one dot, M = 28*TB, K = 5*32 = 160 ----------
    xw = x_ref[...].reshape(28 * tb, 5 * 32)                       # bf16
    y = jnp.dot(xw, t1_ref[...], preferred_element_type=f32)       # (28*TB,168)
    y = jnp.tanh(y + b1_ref[...])

    # ---- avgpool 2x2 : rows via 8-aligned regroup, cols via P1 matmul ------
    y = y.reshape(14, 2 * tb, 168)
    y = 0.5 * (y[:, :tb, :] + y[:, tb:, :])                        # (14,TB,168)
    y = y.reshape(14 * tb, 168).astype(bf16)
    a1 = jnp.dot(y, p1_ref[...], preferred_element_type=f32).astype(bf16)
    # a1: (14*TB, 128) -- 84 valid cols (w'*6 + c), rest zero.

    # ---- conv2 : K-concat slab built with 128-aligned lane stores ----------
    for kh in range(5):
        slab2_ref[:, kh * KPAD:(kh + 1) * KPAD] = a1[kh * tb:(kh + 10) * tb, :]
    z = jnp.dot(slab2_ref[...], t2_ref[...], preferred_element_type=f32)
    z = jnp.tanh(z + b2_ref[...])                                  # (10*TB,160)

    # ---- avgpool 2x2 -------------------------------------------------------
    z = z.reshape(5, 2 * tb, 160)
    z = 0.5 * (z[:, :tb, :] + z[:, tb:, :])                        # (5,TB,160)
    z = z.reshape(5 * tb, 160).astype(bf16)
    a2 = jnp.dot(z, p2_ref[...], preferred_element_type=f32).astype(bf16)
    # a2: (5*TB, 128) -- 80 valid cols, rest zero.

    # ---- conv3 : K-concat slab, single dot, M = TB --------------------------
    for kh in range(5):
        slab3_ref[:, kh * KPAD:(kh + 1) * KPAD] = a2[kh * tb:(kh + 1) * tb, :]
    v = jnp.dot(slab3_ref[...], t3_ref[...], preferred_element_type=f32)
    v = jnp.tanh(v + b3_ref[...])                                  # (TB,120)

    # ---- fc1 + tanh, fc2 (N padded to 128 lanes, lane-dense store) ---------
    h = jnp.tanh(jnp.dot(v.astype(bf16), wf1_ref[...],
                         preferred_element_type=f32) + bf1_ref[...])
    out_ref[...] = (jnp.dot(h.astype(bf16), wf2_ref[...],
                            preferred_element_type=f32) + bf2_ref[...])


# ---------------------------------------------------------------------------
# Wrapper-side weight preparation (tiny; hoisted out of the jitted hot path).
# Activation layout inside the kernel:  A[row, batch, w*C + c].
# ---------------------------------------------------------------------------
def _conv_toeplitz(w, width):
    """PyTorch conv weight (Cout, Cin, K, K) -> (K, width*Cin, OW*Cout) block-
    Toeplitz matrices so that conv == sum_kh  A[kh:kh+OH, :] @ T[kh]."""
    cout, cin, k, _ = w.shape
    ow = width - k + 1
    wt = jnp.transpose(w.astype(jnp.float32), (2, 3, 1, 0))   # (kh, kw, cin, cout)
    win_idx = jnp.arange(width)[:, None]
    ow_idx = jnp.arange(ow)[None, :]
    delta = win_idx - ow_idx                                   # == kw when valid
    valid = ((delta >= 0) & (delta < k)).astype(jnp.float32)
    dclip = jnp.clip(delta, 0, k - 1)
    g = wt[:, dclip]                                           # (k, width, ow, cin, cout)
    g = g * valid[None, :, :, None, None]
    return jnp.transpose(g, (0, 1, 3, 2, 4)).reshape(k, width * cin, ow * cout)


def _conv_bias_row(b, out_width):
    return jnp.tile(b.astype(jnp.float32), out_width).reshape(1, -1)


def _pool_cols(w, c):
    """(W*C, (W//2)*C) matrix averaging adjacent column pairs per channel."""
    ow = w // 2
    base = (jnp.arange(w)[:, None] // 2 ==
            jnp.arange(ow)[None, :]).astype(jnp.float32)
    return 0.5 * jnp.kron(base, jnp.eye(c, dtype=jnp.float32))


def _pad_to(a, axis, size):
    pads = [(0, 0)] * a.ndim
    pads[axis] = (0, size - a.shape[axis])
    return jnp.pad(a, pads)


def _round_up(n, m):
    return (n + m - 1) // m * m


def _const_spec(shape):
    nd = len(shape)
    return pl.BlockSpec(shape, lambda b, _nd=nd: (0,) * _nd)


def prepare_params(params):
    """Build Toeplitz / pooling / padded FC matrices once (outside the jit)."""
    f32, bf16 = jnp.float32, jnp.bfloat16
    # conv1: 5 kh taps concatenated along K (input is im2row'd per call).
    t1 = _conv_toeplitz(params["conv1_w"], 32).reshape(5 * 32, 168)
    b1 = _conv_bias_row(params["conv1_b"], 28)                         # (1,168)
    p1 = _pad_to(_pool_cols(28, 6), 1, KPAD)                           # (168,128)
    # conv2/conv3: per-tap K padded to 128 so in-kernel slab stores are aligned.
    t2 = _pad_to(_conv_toeplitz(params["conv2_w"], 14), 1, KPAD)
    t2 = t2.reshape(5 * KPAD, 160)
    b2 = _conv_bias_row(params["conv2_b"], 10)                         # (1,160)
    p2 = _pad_to(_pool_cols(10, 16), 1, KPAD)                          # (160,128)
    t3 = _pad_to(_conv_toeplitz(params["conv3_w"], 5), 1, KPAD)
    t3 = t3.reshape(5 * KPAD, 120)
    b3 = _conv_bias_row(params["conv3_b"], 1)                          # (1,120)
    wf1 = params["fc1_w"].T.astype(f32)                                # (120,84)
    bf1 = params["fc1_b"].astype(f32).reshape(1, 84)
    wf2 = jnp.zeros((84, N_PAD), f32).at[:, :10].set(params["fc2_w"].T.astype(f32))
    bf2 = jnp.zeros((1, N_PAD), f32).at[0, :10].set(params["fc2_b"].astype(f32))
    return {
        "t1": t1.astype(bf16), "b1": b1, "p1": p1.astype(bf16),
        "t2": t2.astype(bf16), "b2": b2, "p2": p2.astype(bf16),
        "t3": t3.astype(bf16), "b3": b3,
        "wf1": wf1.astype(bf16), "bf1": bf1,
        "wf2": wf2.astype(bf16), "bf2": bf2,
    }


def lenet5_forward(prepped, x, tb=None):
    B = x.shape[0]
    assert x.shape[1:] == (1, 32, 32), "LeNet-5 expects (B, 1, 32, 32) input"
    if tb is None:
        tb = min(64, _round_up(B, 8))      # 64 fits v5e/v7x VMEM budgets
    tb = max(8, _round_up(tb, 8))
    bp = _round_up(B, tb)
    nblk = bp // tb

    # Per-call input prep: im2row the 5 conv1 row-taps along K (lanes) and put
    # the batch in the sublane dim -> layout (28, B, 5*32), bf16 (halves DMA).
    x2 = x.reshape(B, 32, 32).astype(jnp.bfloat16)
    xs = jnp.concatenate([x2[:, kh:kh + 28, :] for kh in range(5)], axis=-1)
    xs = jnp.transpose(xs, (1, 0, 2))                              # (28,B,160)
    if bp != B:
        xs = jnp.pad(xs, ((0, 0), (0, bp - B), (0, 0)))

    w = prepped
    operands = (xs, w["t1"], w["b1"], w["p1"], w["t2"], w["b2"], w["p2"],
                w["t3"], w["b3"], w["wf1"], w["bf1"], w["wf2"], w["bf2"])
    in_specs = [pl.BlockSpec((28, tb, 5 * 32), lambda b: (0, b, 0))]
    in_specs += [_const_spec(op.shape) for op in operands[1:]]

    out = pl.pallas_call(
        functools.partial(_lenet5_kernel, tb=tb),
        out_shape=jax.ShapeDtypeStruct((bp, N_PAD), jnp.float32),
        grid=(nblk,),
        in_specs=in_specs,
        out_specs=pl.BlockSpec((tb, N_PAD), lambda b: (b, 0)),
        scratch_shapes=[
            pltpu.VMEM((10 * tb, 5 * KPAD), jnp.bfloat16),   # conv2 K-slab
            pltpu.VMEM((tb, 5 * KPAD), jnp.bfloat16),        # conv3 K-slab
        ],
        compiler_params=pltpu.CompilerParams(
            dimension_semantics=("parallel",),
            vmem_limit_bytes=32 * 1024 * 1024),
    )(*operands)

    return out[:B, :10]


# ---------------------------------------------------------------------------
# Deterministic PyTorch-style parameter init + pure-JAX reference for checking.
# ---------------------------------------------------------------------------
def init_params(key):
    keys = jax.random.split(key, 10)

    def u(k, shape, fan_in):
        bound = 1.0 / (fan_in ** 0.5)
        return jax.random.uniform(k, shape, jnp.float32, -bound, bound)

    return {
        "conv1_w": u(keys[0], (6, 1, 5, 5), 1 * 5 * 5),
        "conv1_b": u(keys[1], (6,), 1 * 5 * 5),
        "conv2_w": u(keys[2], (16, 6, 5, 5), 6 * 5 * 5),
        "conv2_b": u(keys[3], (16,), 6 * 5 * 5),
        "conv3_w": u(keys[4], (120, 16, 5, 5), 16 * 5 * 5),
        "conv3_b": u(keys[5], (120,), 16 * 5 * 5),
        "fc1_w": u(keys[6], (84, 120), 120),   # PyTorch Linear: (out, in)
        "fc1_b": u(keys[7], (84,), 120),
        "fc2_w": u(keys[8], (10, 84), 84),
        "fc2_b": u(keys[9], (10,), 84),
    }


def _ref_forward(params, x):
    hp = jax.lax.Precision.HIGHEST

    def conv(y, w, b):
        y = jax.lax.conv_general_dilated(
            y, w, window_strides=(1, 1), padding="VALID",
            dimension_numbers=("NCHW", "OIHW", "NCHW"), precision=hp)
        return y + b.reshape(1, -1, 1, 1)

    def pool(y):
        bb, c, h, w = y.shape
        return y.reshape(bb, c, h // 2, 2, w // 2, 2).mean(axis=(3, 5))

    y = jnp.tanh(conv(x, params["conv1_w"], params["conv1_b"]))
    y = pool(y)
    y = jnp.tanh(conv(y, params["conv2_w"], params["conv2_b"]))
    y = pool(y)
    y = jnp.tanh(conv(y, params["conv3_w"], params["conv3_b"]))
    y = y.reshape(y.shape[0], -1)
    y = jnp.tanh(jnp.dot(y, params["fc1_w"].T, precision=hp) + params["fc1_b"])
    y = jnp.dot(y, params["fc2_w"].T, precision=hp) + params["fc2_b"]
    return y


if __name__ == "__main__":
    key = jax.random.PRNGKey(0)
    k_param, k_in1, k_in2 = jax.random.split(key, 3)

    params = init_params(k_param)
    prepped = prepare_params(params)          # hoisted: runs once, not per call
    fwd = jax.jit(lenet5_forward, static_argnames=("tb",))

    # Small test (B=2): single grid block.
    x = jax.random.normal(k_in1, (2, 1, 32, 32), dtype=jnp.float32)
    out = fwd(prepped, x)
    jax.block_until_ready(out)
    assert out.shape == (2, 10), out.shape
    assert out.dtype == jnp.float32
    ref = _ref_forward(params, x)
    # bf16 MXU operands (f32 accumulation) -> slightly looser tolerance.
    err = float(jnp.max(jnp.abs(out - ref)))
    assert err < 5e-2, f"mismatch vs reference: max abs err {err}"

    # Multi-block test (B=18, TB=8 -> 3 grid blocks, padded tail).
    xb = jax.random.normal(k_in2, (18, 1, 32, 32), dtype=jnp.float32)
    outb = fwd(prepped, xb, tb=8)
    jax.block_until_ready(outb)
    refb = _ref_forward(params, xb)
    errb = float(jnp.max(jnp.abs(outb - refb)))
    assert outb.shape == (18, 10)
    assert errb < 5e-2, f"mismatch vs reference (batched): max abs err {errb}"

    print("KERNEL_OK")
</pallas_src>

<mosaic_0001>
module attributes {stable_mosaic.version = 11 : i64} {
  func.func @_lenet5_kernel(%arg0: i32, %arg1: memref<28x8x160xbf16, #tpu.memory_space<vmem>>, %arg2: memref<160x168xbf16, #tpu.memory_space<vmem>>, %arg3: memref<1x168xf32, #tpu.memory_space<vmem>>, %arg4: memref<168x128xbf16, #tpu.memory_space<vmem>>, %arg5: memref<640x160xbf16, #tpu.memory_space<vmem>>, %arg6: memref<1x160xf32, #tpu.memory_space<vmem>>, %arg7: memref<160x128xbf16, #tpu.memory_space<vmem>>, %arg8: memref<640x120xbf16, #tpu.memory_space<vmem>>, %arg9: memref<1x120xf32, #tpu.memory_space<vmem>>, %arg10: memref<120x84xbf16, #tpu.memory_space<vmem>>, %arg11: memref<1x84xf32, #tpu.memory_space<vmem>>, %arg12: memref<84x128xbf16, #tpu.memory_space<vmem>>, %arg13: memref<1x128xf32, #tpu.memory_space<vmem>>, %arg14: memref<8x128xf32, #tpu.memory_space<vmem>>, %arg15: memref<80x640xbf16, #tpu.memory_space<vmem>>, %arg16: memref<8x640xbf16, #tpu.memory_space<vmem>>) attributes {dimension_semantics = [#tpu.dimension_semantics<parallel>], iteration_bounds = array<i64: 1>, scalar_prefetch = 0 : i64, scratch_operands = 2 : i64, tpu.core_type = #tpu.core_type<tc>, window_params = [{transform_indices = @transform_0, window_bounds = array<i64: 28, 8, 160>}, {pipeline_mode = #tpu.pipeline_mode<synchronous>, transform_indices = @transform_1, window_bounds = array<i64: 160, 168>}, {pipeline_mode = #tpu.pipeline_mode<synchronous>, transform_indices = @transform_2, window_bounds = array<i64: 1, 168>}, {pipeline_mode = #tpu.pipeline_mode<synchronous>, transform_indices = @transform_3, window_bounds = array<i64: 168, 128>}, {pipeline_mode = #tpu.pipeline_mode<synchronous>, transform_indices = @transform_4, window_bounds = array<i64: 640, 160>}, {pipeline_mode = #tpu.pipeline_mode<synchronous>, transform_indices = @transform_5, window_bounds = array<i64: 1, 160>}, {pipeline_mode = #tpu.pipeline_mode<synchronous>, transform_indices = @transform_6, window_bounds = array<i64: 160, 128>}, {pipeline_mode = #tpu.pipeline_mode<synchronous>, transform_indices = @transform_7, window_bounds = array<i64: 640, 120>}, {pipeline_mode = #tpu.pipeline_mode<synchronous>, transform_indices = @transform_8, window_bounds = array<i64: 1, 120>}, {pipeline_mode = #tpu.pipeline_mode<synchronous>, transform_indices = @transform_9, window_bounds = array<i64: 120, 84>}, {pipeline_mode = #tpu.pipeline_mode<synchronous>, transform_indices = @transform_10, window_bounds = array<i64: 1, 84>}, {pipeline_mode = #tpu.pipeline_mode<synchronous>, transform_indices = @transform_11, window_bounds = array<i64: 84, 128>}, {pipeline_mode = #tpu.pipeline_mode<synchronous>, transform_indices = @transform_12, window_bounds = array<i64: 1, 128>}, {transform_indices = @transform_13, window_bounds = array<i64: 8, 128>}]} {
    %c0 = arith.constant 0 : index
    %c0_0 = arith.constant 0 : index
    %c0_1 = arith.constant 0 : index
    %0 = vector.load %arg1[%c0, %c0_0, %c0_1] : memref<28x8x160xbf16, #tpu.memory_space<vmem>>, vector<28x8x160xbf16>
    %1 = vector.shape_cast %0 : vector<28x8x160xbf16> to vector<224x160xbf16>
    %c0_2 = arith.constant 0 : index
    %c0_3 = arith.constant 0 : index
    %2 = vector.load %arg2[%c0_2, %c0_3] : memref<160x168xbf16, #tpu.memory_space<vmem>>, vector<160x168xbf16>
    %cst = arith.constant dense<0.000000e+00> : vector<224x168xf32>
    %3 = tpu.matmul %1, %2, %cst {dimension_numbers = #tpu.dot_dimension_numbers<[1], [0], [0], [1], [0, 0, 1, 1], [], []>} : vector<224x160xbf16>, vector<160x168xbf16>, vector<224x168xf32> -> vector<224x168xf32>
    %c0_4 = arith.constant 0 : index
    %c0_5 = arith.constant 0 : index
    %4 = vector.load %arg3[%c0_4, %c0_5] : memref<1x168xf32, #tpu.memory_space<vmem>>, vector<1x168xf32>
    %5 = vector.broadcast %4 : vector<1x168xf32> to vector<224x168xf32>
    %6 = arith.addf %3, %5 : vector<224x168xf32>
    %7 = math.tanh %6 : vector<224x168xf32>
    %8 = vector.shape_cast %7 : vector<224x168xf32> to vector<14x16x168xf32>
    %9 = vector.extract_strided_slice %8 {offsets = [0, 0, 0], sizes = [14, 8, 168], strides = [1, 1, 1]} : vector<14x16x168xf32> to vector<14x8x168xf32>
    %10 = vector.extract_strided_slice %8 {offsets = [0, 8, 0], sizes = [14, 8, 168], strides = [1, 1, 1]} : vector<14x16x168xf32> to vector<14x8x168xf32>
    %11 = arith.addf %9, %10 : vector<14x8x168xf32>
    %cst_6 = arith.constant 5.000000e-01 : f32
    %12 = vector.broadcast %cst_6 : f32 to vector<14x8x168xf32>
    %13 = arith.mulf %12, %11 : vector<14x8x168xf32>
    %14 = vector.shape_cast %13 : vector<14x8x168xf32> to vector<112x168xf32>
    %15 = arith.truncf %14 : vector<112x168xf32> to vector<112x168xbf16>
    %c0_7 = arith.constant 0 : index
    %c0_8 = arith.constant 0 : index
    %16 = vector.load %arg4[%c0_7, %c0_8] : memref<168x128xbf16, #tpu.memory_space<vmem>>, vector<168x128xbf16>
    %cst_9 = arith.constant dense<0.000000e+00> : vector<112x128xf32>
    %17 = tpu.matmul %15, %16, %cst_9 {dimension_numbers = #tpu.dot_dimension_numbers<[1], [0], [0], [1], [0, 0, 1, 1], [], []>} : vector<112x168xbf16>, vector<168x128xbf16>, vector<112x128xf32> -> vector<112x128xf32>
    %18 = arith.truncf %17 : vector<112x128xf32> to vector<112x128xbf16>
    %19 = vector.extract_strided_slice %18 {offsets = [0, 0], sizes = [80, 128], strides = [1, 1]} : vector<112x128xbf16> to vector<80x128xbf16>
    %c0_10 = arith.constant 0 : index
    %c0_11 = arith.constant 0 : index
    %20 = vector.load %arg15[%c0_10, %c0_11] : memref<80x640xbf16, #tpu.memory_space<vmem>>, vector<80x128xbf16>
    tpu.vector_store %arg15[%c0_10, %c0_11], %19 {strides = array<i32>} : memref<80x640xbf16, #tpu.memory_space<vmem>>, vector<80x128xbf16>,
    %21 = vector.extract_strided_slice %18 {offsets = [8, 0], sizes = [80, 128], strides = [1, 1]} : vector<112x128xbf16> to vector<80x128xbf16>
    %c0_12 = arith.constant 0 : index
    %c128 = arith.constant 128 : index
    %22 = vector.load %arg15[%c0_12, %c128] : memref<80x640xbf16, #tpu.memory_space<vmem>>, vector<80x128xbf16>
    tpu.vector_store %arg15[%c0_12, %c128], %21 {strides = array<i32>} : memref<80x640xbf16, #tpu.memory_space<vmem>>, vector<80x128xbf16>,
    %23 = vector.extract_strided_slice %18 {offsets = [16, 0], sizes = [80, 128], strides = [1, 1]} : vector<112x128xbf16> to vector<80x128xbf16>
    %c0_13 = arith.constant 0 : index
    %c256 = arith.constant 256 : index
    %24 = vector.load %arg15[%c0_13, %c256] : memref<80x640xbf16, #tpu.memory_space<vmem>>, vector<80x128xbf16>
    tpu.vector_store %arg15[%c0_13, %c256], %23 {strides = array<i32>} : memref<80x640xbf16, #tpu.memory_space<vmem>>, vector<80x128xbf16>,
    %25 = vector.extract_strided_slice %18 {offsets = [24, 0], sizes = [80, 128], strides = [1, 1]} : vector<112x128xbf16> to vector<80x128xbf16>
    %c0_14 = arith.constant 0 : index
    %c384 = arith.constant 384 : index
    %26 = vector.load %arg15[%c0_14, %c384] : memref<80x640xbf16, #tpu.memory_space<vmem>>, vector<80x128xbf16>
    tpu.vector_store %arg15[%c0_14, %c384], %25 {strides = array<i32>} : memref<80x640xbf16, #tpu.memory_space<vmem>>, vector<80x128xbf16>,
    %27 = vector.extract_strided_slice %18 {offsets = [32, 0], sizes = [80, 128], strides = [1, 1]} : vector<112x128xbf16> to vector<80x128xbf16>
    %c0_15 = arith.constant 0 : index
    %c512 = arith.constant 512 : index
    %28 = vector.load %arg15[%c0_15, %c512] : memref<80x640xbf16, #tpu.memory_space<vmem>>, vector<80x128xbf16>
    tpu.vector_store %arg15[%c0_15, %c512], %27 {strides = array<i32>} : memref<80x640xbf16, #tpu.memory_space<vmem>>, vector<80x128xbf16>,
    %c0_16 = arith.constant 0 : index
    %c0_17 = arith.constant 0 : index
    %29 = vector.load %arg15[%c0_16, %c0_17] : memref<80x640xbf16, #tpu.memory_space<vmem>>, vector<80x640xbf16>
    %c0_18 = arith.constant 0 : index
    %c0_19 = arith.constant 0 : index
    %30 = vector.load %arg5[%c0_18, %c0_19] : memref<640x160xbf16, #tpu.memory_space<vmem>>, vector<640x160xbf16>
    %cst_20 = arith.constant dense<0.000000e+00> : vector<80x160xf32>
    %31 = tpu.matmul %29, %30, %cst_20 {dimension_numbers = #tpu.dot_dimension_numbers<[1], [0], [0], [1], [0, 0, 1, 1], [], []>} : vector<80x640xbf16>, vector<640x160xbf16>, vector<80x160xf32> -> vector<80x160xf32>
    %c0_21 = arith.constant 0 : index
    %c0_22 = arith.constant 0 : index
    %32 = vector.load %arg6[%c0_21, %c0_22] : memref<1x160xf32, #tpu.memory_space<vmem>>, vector<1x160xf32>
    %33 = vector.broadcast %32 : vector<1x160xf32> to vector<80x160xf32>
    %34 = arith.addf %31, %33 : vector<80x160xf32>
    %35 = math.tanh %34 : vector<80x160xf32>
    %36 = vector.shape_cast %35 : vector<80x160xf32> to vector<5x16x160xf32>
    %37 = vector.extract_strided_slice %36 {offsets = [0, 0, 0], sizes = [5, 8, 160], strides = [1, 1, 1]} : vector<5x16x160xf32> to vector<5x8x160xf32>
    %38 = vector.extract_strided_slice %36 {offsets = [0, 8, 0], sizes = [5, 8, 160], strides = [1, 1, 1]} : vector<5x16x160xf32> to vector<5x8x160xf32>
    %39 = arith.addf %37, %38 : vector<5x8x160xf32>
    %cst_23 = arith.constant 5.000000e-01 : f32
    %40 = vector.broadcast %cst_23 : f32 to vector<5x8x160xf32>
    %41 = arith.mulf %40, %39 : vector<5x8x160xf32>
    %42 = vector.shape_cast %41 : vector<5x8x160xf32> to vector<40x160xf32>
    %43 = arith.truncf %42 : vector<40x160xf32> to vector<40x160xbf16>
    %c0_24 = arith.constant 0 : index
    %c0_25 = arith.constant 0 : index
    %44 = vector.load %arg7[%c0_24, %c0_25] : memref<160x128xbf16, #tpu.memory_space<vmem>>, vector<160x128xbf16>
    %cst_26 = arith.constant dense<0.000000e+00> : vector<40x128xf32>
    %45 = tpu.matmul %43, %44, %cst_26 {dimension_numbers = #tpu.dot_dimension_numbers<[1], [0], [0], [1], [0, 0, 1, 1], [], []>} : vector<40x160xbf16>, vector<160x128xbf16>, vector<40x128xf32> -> vector<40x128xf32>
    %46 = arith.truncf %45 : vector<40x128xf32> to vector<40x128xbf16>
    %47 = vector.extract_strided_slice %46 {offsets = [0, 0], sizes = [8, 128], strides = [1, 1]} : vector<40x128xbf16> to vector<8x128xbf16>
    %c0_27 = arith.constant 0 : index
    %c0_28 = arith.constant 0 : index
    %48 = vector.load %arg16[%c0_27, %c0_28] : memref<8x640xbf16, #tpu.memory_space<vmem>>, vector<8x128xbf16>
    tpu.vector_store %arg16[%c0_27, %c0_28], %47 {strides = array<i32>} : memref<8x640xbf16, #tpu.memory_space<vmem>>, vector<8x128xbf16>,
    %49 = vector.extract_strided_slice %46 {offsets = [8, 0], sizes = [8, 128], strides = [1, 1]} : vector<40x128xbf16> to vector<8x128xbf16>
    %c0_29 = arith.constant 0 : index
    %c128_30 = arith.constant 128 : index
    %50 = vector.load %arg16[%c0_29, %c128_30] : memref<8x640xbf16, #tpu.memory_space<vmem>>, vector<8x128xbf16>
    tpu.vector_store %arg16[%c0_29, %c128_30], %49 {strides = array<i32>} : memref<8x640xbf16, #tpu.memory_space<vmem>>, vector<8x128xbf16>,
    %51 = vector.extract_strided_slice %46 {offsets = [16, 0], sizes = [8, 128], strides = [1, 1]} : vector<40x128xbf16> to vector<8x128xbf16>
    %c0_31 = arith.constant 0 : index
    %c256_32 = arith.constant 256 : index
    %52 = vector.load %arg16[%c0_31, %c256_32] : memref<8x640xbf16, #tpu.memory_space<vmem>>, vector<8x128xbf16>
    tpu.vector_store %arg16[%c0_31, %c256_32], %51 {strides = array<i32>} : memref<8x640xbf16, #tpu.memory_space<vmem>>, vector<8x128xbf16>,
    %53 = vector.extract_strided_slice %46 {offsets = [24, 0], sizes = [8, 128], strides = [1, 1]} : vector<40x128xbf16> to vector<8x128xbf16>
    %c0_33 = arith.constant 0 : index
    %c384_34 = arith.constant 384 : index
    %54 = vector.load %arg16[%c0_33, %c384_34] : memref<8x640xbf16, #tpu.memory_space<vmem>>, vector<8x128xbf16>
    tpu.vector_store %arg16[%c0_33, %c384_34], %53 {strides = array<i32>} : memref<8x640xbf16, #tpu.memory_space<vmem>>, vector<8x128xbf16>,
    %55 = vector.extract_strided_slice %46 {offsets = [32, 0], sizes = [8, 128], strides = [1, 1]} : vector<40x128xbf16> to vector<8x128xbf16>
    %c0_35 = arith.constant 0 : index
    %c512_36 = arith.constant 512 : index
    %56 = vector.load %arg16[%c0_35, %c512_36] : memref<8x640xbf16, #tpu.memory_space<vmem>>, vector<8x128xbf16>
    tpu.vector_store %arg16[%c0_35, %c512_36], %55 {strides = array<i32>} : memref<8x640xbf16, #tpu.memory_space<vmem>>, vector<8x128xbf16>,
    %c0_37 = arith.constant 0 : index
    %c0_38 = arith.constant 0 : index
    %57 = vector.load %arg16[%c0_37, %c0_38] : memref<8x640xbf16, #tpu.memory_space<vmem>>, vector<8x640xbf16>
    %c0_39 = arith.constant 0 : index
    %c0_40 = arith.constant 0 : index
    %58 = vector.load %arg8[%c0_39, %c0_40] : memref<640x120xbf16, #tpu.memory_space<vmem>>, vector<640x120xbf16>
    %cst_41 = arith.constant dense<0.000000e+00> : vector<8x120xf32>
    %59 = tpu.matmul %57, %58, %cst_41 {dimension_numbers = #tpu.dot_dimension_numbers<[1], [0], [0], [1], [0, 0, 1, 1], [], []>} : vector<8x640xbf16>, vector<640x120xbf16>, vector<8x120xf32> -> vector<8x120xf32>
    %c0_42 = arith.constant 0 : index
    %c0_43 = arith.constant 0 : index
    %60 = vector.load %arg9[%c0_42, %c0_43] : memref<1x120xf32, #tpu.memory_space<vmem>>, vector<1x120xf32>
    %61 = vector.broadcast %60 : vector<1x120xf32> to vector<8x120xf32>
    %62 = arith.addf %59, %61 : vector<8x120xf32>
    %63 = math.tanh %62 : vector<8x120xf32>
    %64 = arith.truncf %63 : vector<8x120xf32> to vector<8x120xbf16>
    %c0_44 = arith.constant 0 : index
    %c0_45 = arith.constant 0 : index
    %65 = vector.load %arg10[%c0_44, %c0_45] : memref<120x84xbf16, #tpu.memory_space<vmem>>, vector<120x84xbf16>
    %cst_46 = arith.constant dense<0.000000e+00> : vector<8x84xf32>
    %66 = tpu.matmul %64, %65, %cst_46 {dimension_numbers = #tpu.dot_dimension_numbers<[1], [0], [0], [1], [0, 0, 1, 1], [], []>} : vector<8x120xbf16>, vector<120x84xbf16>, vector<8x84xf32> -> vector<8x84xf32>
    %c0_47 = arith.constant 0 : index
    %c0_48 = arith.constant 0 : index
    %67 = vector.load %arg11[%c0_47, %c0_48] : memref<1x84xf32, #tpu.memory_space<vmem>>, vector<1x84xf32>
    %68 = vector.broadcast %67 : vector<1x84xf32> to vector<8x84xf32>
    %69 = arith.addf %66, %68 : vector<8x84xf32>
    %70 = math.tanh %69 : vector<8x84xf32>
    %71 = arith.truncf %70 : vector<8x84xf32> to vector<8x84xbf16>
    %c0_49 = arith.constant 0 : index
    %c0_50 = arith.constant 0 : index
    %72 = vector.load %arg12[%c0_49, %c0_50] : memref<84x128xbf16, #tpu.memory_space<vmem>>, vector<84x128xbf16>
    %cst_51 = arith.constant dense<0.000000e+00> : vector<8x128xf32>
    %73 = tpu.matmul %71, %72, %cst_51 {dimension_numbers = #tpu.dot_dimension_numbers<[1], [0], [0], [1], [0, 0, 1, 1], [], []>} : vector<8x84xbf16>, vector<84x128xbf16>, vector<8x128xf32> -> vector<8x128xf32>
    %c0_52 = arith.constant 0 : index
    %c0_53 = arith.constant 0 : index
    %74 = vector.load %arg13[%c0_52, %c0_53] : memref<1x128xf32, #tpu.memory_space<vmem>>, vector<1x128xf32>
    %75 = vector.broadcast %74 : vector<1x128xf32> to vector<8x128xf32>
    %76 = arith.addf %73, %75 : vector<8x128xf32>
    %c0_54 = arith.constant 0 : index
    %c0_55 = arith.constant 0 : index
    %77 = vector.load %arg14[%c0_54, %c0_55] : memref<8x128xf32, #tpu.memory_space<vmem>>, vector<8x128xf32>
    tpu.vector_store %arg14[%c0_54, %c0_55], %76 {strides = array<i32>} : memref<8x128xf32, #tpu.memory_space<vmem>>, vector<8x128xf32>,
    return
  }
  func.func @transform_0(%arg0: i32) -> (i32, i32, i32) {
    %c0_i32 = arith.constant 0 : i32
    %c0_i32_0 = arith.constant 0 : i32
    %c0_i32_1 = arith.constant 0 : i32
    return %c0_i32, %arg0, %c0_i32_0 : i32, i32, i32
  }
  func.func @transform_1(%arg0: i32) -> (i32, i32) {
    %c0_i32 = arith.constant 0 : i32
    %c0_i32_0 = arith.constant 0 : i32
    %c0_i32_1 = arith.constant 0 : i32
    return %c0_i32, %c0_i32_0 : i32, i32
  }
  func.func @transform_2(%arg0: i32) -> (i32, i32) {
    %c0_i32 = arith.constant 0 : i32
    %c0_i32_0 = arith.constant 0 : i32
    %c0_i32_1 = arith.constant 0 : i32
    return %c0_i32, %c0_i32_0 : i32, i32
  }
  func.func @transform_3(%arg0: i32) -> (i32, i32) {
    %c0_i32 = arith.constant 0 : i32
    %c0_i32_0 = arith.constant 0 : i32
    %c0_i32_1 = arith.constant 0 : i32
    return %c0_i32, %c0_i32_0 : i32, i32
  }
  func.func @transform_4(%arg0: i32) -> (i32, i32) {
    %c0_i32 = arith.constant 0 : i32
    %c0_i32_0 = arith.constant 0 : i32
    %c0_i32_1 = arith.constant 0 : i32
    return %c0_i32, %c0_i32_0 : i32, i32
  }
  func.func @transform_5(%arg0: i32) -> (i32, i32) {
    %c0_i32 = arith.constant 0 : i32
    %c0_i32_0 = arith.constant 0 : i32
    %c0_i32_1 = arith.constant 0 : i32
    return %c0_i32, %c0_i32_0 : i32, i32
  }
  func.func @transform_6(%arg0: i32) -> (i32, i32) {
    %c0_i32 = arith.constant 0 : i32
    %c0_i32_0 = arith.constant 0 : i32
    %c0_i32_1 = arith.constant 0 : i32
    return %c0_i32, %c0_i32_0 : i32, i32
  }
  func.func @transform_7(%arg0: i32) -> (i32, i32) {
    %c0_i32 = arith.constant 0 : i32
    %c0_i32_0 = arith.constant 0 : i32
    %c0_i32_1 = arith.constant 0 : i32
    return %c0_i32, %c0_i32_0 : i32, i32
  }
  func.func @transform_8(%arg0: i32) -> (i32, i32) {
    %c0_i32 = arith.constant 0 : i32
    %c0_i32_0 = arith.constant 0 : i32
    %c0_i32_1 = arith.constant 0 : i32
    return %c0_i32, %c0_i32_0 : i32, i32
  }
  func.func @transform_9(%arg0: i32) -> (i32, i32) {
    %c0_i32 = arith.constant 0 : i32
    %c0_i32_0 = arith.constant 0 : i32
    %c0_i32_1 = arith.constant 0 : i32
    return %c0_i32, %c0_i32_0 : i32, i32
  }
  func.func @transform_10(%arg0: i32) -> (i32, i32) {
    %c0_i32 = arith.constant 0 : i32
    %c0_i32_0 = arith.constant 0 : i32
    %c0_i32_1 = arith.constant 0 : i32
    return %c0_i32, %c0_i32_0 : i32, i32
  }
  func.func @transform_11(%arg0: i32) -> (i32, i32) {
    %c0_i32 = arith.constant 0 : i32
    %c0_i32_0 = arith.constant 0 : i32
    %c0_i32_1 = arith.constant 0 : i32
    return %c0_i32, %c0_i32_0 : i32, i32
  }
  func.func @transform_12(%arg0: i32) -> (i32, i32) {
    %c0_i32 = arith.constant 0 : i32
    %c0_i32_0 = arith.constant 0 : i32
    %c0_i32_1 = arith.constant 0 : i32
    return %c0_i32, %c0_i32_0 : i32, i32
  }
  func.func @transform_13(%arg0: i32) -> (i32, i32) {
    %c0_i32 = arith.constant 0 : i32
    %c0_i32_0 = arith.constant 0 : i32
    return %arg0, %c0_i32 : i32, i32
  }
}

</mosaic_0001>

<llo_original>
// kernel: lenet5_forward.1
$region0: #{lenet5_forward.1}
  #allocation0 [shape = 'u32[]', space=smem, size = 0x4, offset = 0x4, fixed_abs, tag = 'smem constant byte address 0x4 - core index']
  #allocation1 [shape = 'u32[144,128]{1,0:T(1,128)}', space=vmem, size = 0x12000, scoped, tag = 'internal scratch']
  #allocation2 [shape = 'bf16[80,640]{1,0:T(8,128)(2,1)}', space=vmem, size = 0x19000, scoped, tag = 'scratch operand']
  #allocation3 [shape = 'bf16[8,640]{1,0:T(8,128)(2,1)}', space=vmem, size = 0x2800, scoped, tag = 'scratch operand']
  %s0 = inlined_call_operand.vmem [shape: bf16[28,8,160], index: 0, kind: input, shape index: {}]
  %s1 = inlined_call_operand.vmem [shape: bf16[160,168], index: 1, kind: input, shape index: {}]
  %s2 = inlined_call_operand.vmem [shape: f32[1,168], index: 2, kind: input, shape index: {}]
  %s3 = inlined_call_operand.vmem [shape: bf16[168,128], index: 3, kind: input, shape index: {}]
  %s4 = inlined_call_operand.vmem [shape: bf16[640,160], index: 4, kind: input, shape index: {}]
  %s5 = inlined_call_operand.vmem [shape: f32[1,160], index: 5, kind: input, shape index: {}]
  %s6 = inlined_call_operand.vmem [shape: bf16[160,128], index: 6, kind: input, shape index: {}]
  %s7 = inlined_call_operand.vmem [shape: bf16[640,120], index: 7, kind: input, shape index: {}]
  %s8 = inlined_call_operand.vmem [shape: f32[1,120], index: 8, kind: input, shape index: {}]
  %s9 = inlined_call_operand.vmem [shape: bf16[120,84], index: 9, kind: input, shape index: {}]
  %s10 = inlined_call_operand.vmem [shape: f32[1,84], index: 10, kind: input, shape index: {}]
  %s11 = inlined_call_operand.vmem [shape: bf16[84,128], index: 11, kind: input, shape index: {}]
  %s12 = inlined_call_operand.vmem [shape: f32[1,128], index: 12, kind: input, shape index: {}]
  %s13 = inlined_call_operand.vmem [shape: f32[8,128], index: 13, kind: output, shape index: {}]
  %s14 = sld [smem:[#allocation0]]
  $region62: #{lenet5_forward.1} parent=0
    _
  %s16 = ssub.s32 1, %s14
  %s17 = scalar_select 0, %s16, %s14
  // Predicated region
  $region2: #{lenet5_forward.1} parent=0 // pred_check
    _
  $region3: #{lenet5_forward.1} parent=0 // pred_check_branch
    %19 = sbr.rel (0) target = $region5
  $region4: #{lenet5_forward.1} parent=0 // pred_region
    _
  $region5: #{lenet5_forward.1} parent=0 // pred_fallthru
    _
  // Predicated region
  $region6: #{lenet5_forward.1} parent=0 // pred_check
    _
  $region7: #{lenet5_forward.1} parent=0 // pred_check_branch
    %21 = sbr.rel (0) target = $region9
  $region8: #{lenet5_forward.1} parent=0 // pred_region
    _
  $region9: #{lenet5_forward.1} parent=0 // pred_fallthru
    _
  // Predicated region
  $region10: #{lenet5_forward.1} parent=0 // pred_check
    _
  $region11: #{lenet5_forward.1} parent=0 // pred_check_branch
    %23 = sbr.rel (0) target = $region13
  $region12: #{lenet5_forward.1} parent=0 // pred_region
    _
  $region13: #{lenet5_forward.1} parent=0 // pred_fallthru
    _
  // Predicated region
  $region14: #{lenet5_forward.1} parent=0 // pred_check
    _
  $region15: #{lenet5_forward.1} parent=0 // pred_check_branch
    %25 = sbr.rel (0) target = $region17
  $region16: #{lenet5_forward.1} parent=0 // pred_region
    _
  $region17: #{lenet5_forward.1} parent=0 // pred_fallthru
    _
  // Predicated region
  $region18: #{lenet5_forward.1} parent=0 // pred_check
    _
  $region19: #{lenet5_forward.1} parent=0 // pred_check_branch
    %27 = sbr.rel (0) target = $region21
  $region20: #{lenet5_forward.1} parent=0 // pred_region
    _
  $region21: #{lenet5_forward.1} parent=0 // pred_fallthru
    _
  // Predicated region
  $region22: #{lenet5_forward.1} parent=0 // pred_check
    _
  $region23: #{lenet5_forward.1} parent=0 // pred_check_branch
    %29 = sbr.rel (0) target = $region25
  $region24: #{lenet5_forward.1} parent=0 // pred_region
    _
  $region25: #{lenet5_forward.1} parent=0 // pred_fallthru
    _
  // Predicated region
  $region26: #{lenet5_forward.1} parent=0 // pred_check
    _
  $region27: #{lenet5_forward.1} parent=0 // pred_check_branch
    %31 = sbr.rel (0) target = $region29
  $region28: #{lenet5_forward.1} parent=0 // pred_region
    _
  $region29: #{lenet5_forward.1} parent=0 // pred_fallthru
    _
  // Predicated region
  $region30: #{lenet5_forward.1} parent=0 // pred_check
    _
  $region31: #{lenet5_forward.1} parent=0 // pred_check_branch
    %33 = sbr.rel (0) target = $region33
  $region32: #{lenet5_forward.1} parent=0 // pred_region
    _
  $region33: #{lenet5_forward.1} parent=0 // pred_fallthru
    _
  // Predicated region
  $region34: #{lenet5_forward.1} parent=0 // pred_check
    _
  $region35: #{lenet5_forward.1} parent=0 // pred_check_branch
    %35 = sbr.rel (0) target = $region37
  $region36: #{lenet5_forward.1} parent=0 // pred_region
    _
  $region37: #{lenet5_forward.1} parent=0 // pred_fallthru
    _
  // Predicated region
  $region38: #{lenet5_forward.1} parent=0 // pred_check
    _
  $region39: #{lenet5_forward.1} parent=0 // pred_check_branch
    %37 = sbr.rel (0) target = $region41
  $region40: #{lenet5_forward.1} parent=0 // pred_region
    _
  $region41: #{lenet5_forward.1} parent=0 // pred_fallthru
    _
  // Predicated region
  $region42: #{lenet5_forward.1} parent=0 // pred_check
    _
  $region43: #{lenet5_forward.1} parent=0 // pred_check_branch
    %39 = sbr.rel (0) target = $region45
  $region44: #{lenet5_forward.1} parent=0 // pred_region
    _
  $region45: #{lenet5_forward.1} parent=0 // pred_fallthru
    _
  // Predicated region
  $region46: #{lenet5_forward.1} parent=0 // pred_check
    _
  $region47: #{lenet5_forward.1} parent=0 // pred_check_branch
    %41 = sbr.rel (0) target = $region49
  $region48: #{lenet5_forward.1} parent=0 // pred_region
    _
  $region49: #{lenet5_forward.1} parent=0 // pred_fallthru
    _
  // Predicated region
  $region50: #{lenet5_forward.1} parent=0 // pred_check
    _
  $region51: #{lenet5_forward.1} parent=0 // pred_check_branch
    %43 = sbr.rel (0) target = $region53
  $region52: #{lenet5_forward.1} parent=0 // pred_region
    _
  $region53: #{lenet5_forward.1} parent=0 // pred_fallthru
    _
  %v45 = vld [vmem:[%s0] sm:$0xff]
  %v46 = vld [vmem:[%s0 + $0x8] sm:$0xff]
  %v47 = vld [vmem:[%s0 + $0x10] sm:$0xff]
  %v48 = vld [vmem:[%s0 + $0x18] sm:$0xff]
  %v49 = vld [vmem:[%s0 + $0x20] sm:$0xff]
  %v50 = vld [vmem:[%s0 + $0x28] sm:$0xff]
  %v51 = vld [vmem:[%s0 + $0x30] sm:$0xff]
  %v52 = vld [vmem:[%s0 + $0x38] sm:$0xff]
  %v53 = vld [vmem:[%s0 + $0x40] sm:$0xff]
  %v54 = vld [vmem:[%s0 + $0x48] sm:$0xff]
  %v55 = vld [vmem:[%s0 + $0x50] sm:$0xff]
  %v56 = vld [vmem:[%s0 + $0x58] sm:$0xff]
  %v57 = vld [vmem:[%s0 + $0x60] sm:$0xff]
  %v58 = vld [vmem:[%s0 + $0x68] sm:$0xff]
  %v59 = vld [vmem:[%s0 + $0x70] sm:$0xff]
  %v60 = vld [vmem:[%s0 + $0x78] sm:$0xff]
  %v61 = vld [vmem:[%s0 + $0x80] sm:$0xff]
  %v62 = vld [vmem:[%s0 + $0x88] sm:$0xff]
  %v63 = vld [vmem:[%s0 + $0x90] sm:$0xff]
  %v64 = vld [vmem:[%s0 + $0x98] sm:$0xff]
  %v65 = vld [vmem:[%s0 + $0xa0] sm:$0xff]
  %v66 = vld [vmem:[%s0 + $0xa8] sm:$0xff]
  %v67 = vld [vmem:[%s0 + $0xb0] sm:$0xff]
  %v68 = vld [vmem:[%s0 + $0xb8] sm:$0xff]
  %v69 = vld [vmem:[%s0 + $0xc0] sm:$0xff]
  %v70 = vld [vmem:[%s0 + $0xc8] sm:$0xff]
  %v71 = vld [vmem:[%s0 + $0xd0] sm:$0xff]
  %v72 = vld [vmem:[%s0 + $0xd8] sm:$0xff]
  %v73 = vld [vmem:[%s1] sm:$0xff]
  %v74 = vld [vmem:[%s1 + $0x8] sm:$0xff]
  %v75 = vld [vmem:[%s1 + $0x10] sm:$0xff]
  %v76 = vld [vmem:[%s1 + $0x18] sm:$0xff]
  %v77 = vld [vmem:[%s1 + $0x20] sm:$0xff]
  %v78 = vld [vmem:[%s1 + $0x28] sm:$0xff]
  %v79 = vld [vmem:[%s1 + $0x30] sm:$0xff]
  %v80 = vld [vmem:[%s1 + $0x38] sm:$0xff]
  %v81 = vld [vmem:[%s1 + $0x40] sm:$0xff]
  %v82 = vld [vmem:[%s1 + $0x48] sm:$0xff]
  %v83 = vld [vmem:[%s1 + $0x50] sm:$0xff]
  %v84 = vld [vmem:[%s1 + $0x58] sm:$0xff]
  %v85 = vld [vmem:[%s1 + $0x60] sm:$0xff]
  %v86 = vld [vmem:[%s1 + $0x68] sm:$0xff]
  %v87 = vld [vmem:[%s1 + $0x70] sm:$0xff]
  %v88 = vld [vmem:[%s1 + $0x78] sm:$0xff]
  %v89 = vld [vmem:[%s1 + $0x80] sm:$0xff]
  %v90 = vld [vmem:[%s1 + $0x88] sm:$0xff]
  %v91 = vld [vmem:[%s1 + $0x90] sm:$0xff]
  %v92 = vld [vmem:[%s1 + $0x98] sm:$0xff]
  %v93 = vld [vmem:[%s2] sm:$0x3]
  %v95 = vlaneseq
  %v96 = vshrl.u32 %v95, 7
  %v97 = vsub.s32 0, %v96
  %v98 = vrot.slane %v93, %v97
  %v99 = vlaneseq
  %v100 = vshrl.u32 %v99, 7
  %v101 = vsub.s32 1, %v100
  %v102 = vrot.slane %v93, %v101
  %v133 = vunpack.c.l.b16 %v45
  %v134 = vunpack.c.h.b16 %v45
  %v135 = vunpack.c.l.b16 %v46
  %v136 = vunpack.c.h.b16 %v46
  %v137 = vunpack.c.l.b16 %v47
  %v138 = vunpack.c.h.b16 %v47
  %v139 = vunpack.c.l.b16 %v48
  %v140 = vunpack.c.h.b16 %v48
  %v141 = vunpack.c.l.b16 %v49
  %v142 = vunpack.c.h.b16 %v49
  %v143 = vunpack.c.l.b16 %v50
  %v144 = vunpack.c.h.b16 %v50
  %v145 = vunpack.c.l.b16 %v51
  %v146 = vunpack.c.h.b16 %v51
  %v147 = vunpack.c.l.b16 %v52
  %v148 = vunpack.c.h.b16 %v52
  %v149 = vunpack.c.l.b16 %v53
  %v150 = vunpack.c.h.b16 %v53
  %v151 = vunpack.c.l.b16 %v54
  %v152 = vunpack.c.h.b16 %v54
  %v153 = vunpack.c.l.b16 %v55
  %v154 = vunpack.c.h.b16 %v55
  %v155 = vunpack.c.l.b16 %v56
  %v156 = vunpack.c.h.b16 %v56
  %v157 = vunpack.c.l.b16 %v57
  %v158 = vunpack.c.h.b16 %v57
  %v159 = vunpack.c.l.b16 %v58
  %v160 = vunpack.c.h.b16 %v58
  %v161 = vunpack.c.l.b16 %v59
  %v162 = vunpack.c.h.b16 %v59
  %v163 = vunpack.c.l.b16 %v60
  %v164 = vunpack.c.h.b16 %v60
  %v165 = vunpack.c.l.b16 %v61
  %v166 = vunpack.c.h.b16 %v61
  %v167 = vunpack.c.l.b16 %v62
  %v168 = vunpack.c.h.b16 %v62
  %v169 = vunpack.c.l.b16 %v63
  %v170 = vunpack.c.h.b16 %v63
  %v171 = vunpack.c.l.b16 %v64
  %v172 = vunpack.c.h.b16 %v64
  %v173 = vunpack.c.l.b16 %v65
  %v174 = vunpack.c.h.b16 %v65
  %v175 = vunpack.c.l.b16 %v66
  %v176 = vunpack.c.h.b16 %v66
  %v177 = vunpack.c.l.b16 %v67
  %v178 = vunpack.c.h.b16 %v67
  %v179 = vunpack.c.l.b16 %v68
  %v180 = vunpack.c.h.b16 %v68
  %v181 = vunpack.c.l.b16 %v69
  %v182 = vunpack.c.h.b16 %v69
  %v183 = vunpack.c.l.b16 %v70
  %v184 = vunpack.c.h.b16 %v70
  %v185 = vunpack.c.l.b16 %v71
  %v186 = vunpack.c.h.b16 %v71
  %v187 = vunpack.c.l.b16 %v72
  %v188 = vunpack.c.h.b16 %v72
  %v189 = vpack.c.b16 %v135, %v133
  %v190 = vpack.c.b16 %v136, %v134
  %v191 = vpack.c.b16 %v139, %v137
  %v192 = vpack.c.b16 %v140, %v138
  %v193 = vpack.c.b16 %v143, %v141
  %v194 = vpack.c.b16 %v144, %v142
  %v195 = vpack.c.b16 %v147, %v145
  %v196 = vpack.c.b16 %v148, %v146
  %v197 = vpack.c.b16 %v151, %v149
  %v198 = vpack.c.b16 %v152, %v150
  %v199 = vpack.c.b16 %v155, %v153
  %v200 = vpack.c.b16 %v156, %v154
  %v201 = vpack.c.b16 %v159, %v157
  %v202 = vpack.c.b16 %v160, %v158
  %v203 = vpack.c.b16 %v163, %v161
  %v204 = vpack.c.b16 %v164, %v162
  %v205 = vpack.c.b16 %v167, %v165
  %v206 = vpack.c.b16 %v168, %v166
  %v207 = vpack.c.b16 %v171, %v169
  %v208 = vpack.c.b16 %v172, %v170
  %v209 = vpack.c.b16 %v175, %v173
  %v210 = vpack.c.b16 %v176, %v174
  %v211 = vpack.c.b16 %v179, %v177
  %v212 = vpack.c.b16 %v180, %v178
  %v213 = vpack.c.b16 %v183, %v181
  %v214 = vpack.c.b16 %v184, %v182
  %v215 = vpack.c.b16 %v187, %v185
  %v216 = vpack.c.b16 %v188, %v186
  %v251 = vunpack.c.l.b16 %v73
  %v252 = vunpack.c.h.b16 %v73
  %v253 = vunpack.c.l.b16 %v74
  %v254 = vunpack.c.h.b16 %v74
  %v255 = vunpack.c.l.b16 %v75
  %v256 = vunpack.c.h.b16 %v75
  %v257 = vunpack.c.l.b16 %v76
  %v258 = vunpack.c.h.b16 %v76
  %v259 = vunpack.c.l.b16 %v77
  %v260 = vunpack.c.h.b16 %v77
  %v261 = vunpack.c.l.b16 %v78
  %v262 = vunpack.c.h.b16 %v78
  %v263 = vunpack.c.l.b16 %v79
  %v264 = vunpack.c.h.b16 %v79
  %v265 = vunpack.c.l.b16 %v80
  %v266 = vunpack.c.h.b16 %v80
  %v267 = vunpack.c.l.b16 %v81
  %v268 = vunpack.c.h.b16 %v81
  %v269 = vunpack.c.l.b16 %v82
  %v270 = vunpack.c.h.b16 %v82
  %v271 = vunpack.c.l.b16 %v83
  %v272 = vunpack.c.h.b16 %v83
  %v273 = vunpack.c.l.b16 %v84
  %v274 = vunpack.c.h.b16 %v84
  %v275 = vunpack.c.l.b16 %v85
  %v276 = vunpack.c.h.b16 %v85
  %v277 = vunpack.c.l.b16 %v86
  %v278 = vunpack.c.h.b16 %v86
  %v279 = vunpack.c.l.b16 %v87
  %v280 = vunpack.c.h.b16 %v87
  %v281 = vunpack.c.l.b16 %v88
  %v282 = vunpack.c.h.b16 %v88
  %v283 = vunpack.c.l.b16 %v89
  %v284 = vunpack.c.h.b16 %v89
  %v285 = vunpack.c.l.b16 %v90
  %v286 = vunpack.c.h.b16 %v90
  %v287 = vunpack.c.l.b16 %v91
  %v288 = vunpack.c.h.b16 %v91
  %v289 = vunpack.c.l.b16 %v92
  %v290 = vunpack.c.h.b16 %v92
  %v291 = vpack.c.b16 %v253, %v251
  %v292 = vpack.c.b16 %v254, %v252
  %v293 = vpack.c.b16 %v257, %v255
  %v294 = vpack.c.b16 %v258, %v256
  %v295 = vpack.c.b16 %v261, %v259
  %v296 = vpack.c.b16 %v262, %v260
  %v297 = vpack.c.b16 %v265, %v263
  %v298 = vpack.c.b16 %v266, %v264
  %v299 = vpack.c.b16 %v269, %v267
  %v300 = vpack.c.b16 %v270, %v268
  %v301 = vpack.c.b16 %v273, %v271
  %v302 = vpack.c.b16 %v274, %v272
  %v303 = vpack.c.b16 %v277, %v275
  %v304 = vpack.c.b16 %v278, %v276
  %v305 = vpack.c.b16 %v281, %v279
  %v306 = vpack.c.b16 %v282, %v280
  %v307 = vpack.c.b16 %v285, %v283
  %v308 = vpack.c.b16 %v286, %v284
  %v309 = vpack.c.b16 %v289, %v287
  %v310 = vpack.c.b16 %v290, %v288
  %vm331 = vcmask 261120
  %v333 = vsel %vm331, %v190, 0
  %v336 = vsel %vm331, %v192, 0
  %v339 = vsel %vm331, %v194, 0
  %v342 = vsel %vm331, %v196, 0
  %v345 = vsel %vm331, %v198, 0
  %v348 = vsel %vm331, %v200, 0
  %v351 = vsel %vm331, %v202, 0
  %v354 = vsel %vm331, %v204, 0
  %v357 = vsel %vm331, %v206, 0
  %v360 = vsel %vm331, %v208, 0
  %v363 = vsel %vm331, %v210, 0
  %v366 = vsel %vm331, %v212, 0
  %v369 = vsel %vm331, %v214, 0
  %v372 = vsel %vm331, %v216, 0
  %374 = vmatprep.subr.bf16.mxu0 %v306
  %375 = vmatpush1.bf16.msra.mxu0 %v305
  %376 = vmatprep.subr.bf16.mxu0 %v304
  %377 = vmatpush1.bf16.msra.mxu0 %v303
  %378 = vmatprep.subr.bf16.mxu0 %v302
  %379 = vmatpush1.bf16.msra.mxu0 %v301
  %380 = vmatprep.subr.bf16.mxu0 %v300
  %381 = vmatpush1.bf16.msra.mxu0 %v299
  %382 = vmatprep.subr.bf16.mxu0 %v298
  %383 = vmatpush1.bf16.msra.mxu0 %v297
  %384 = vmatprep.subr.bf16.mxu0 %v296
  %385 = vmatpush1.bf16.msra.mxu0 %v295
  %386 = vmatprep.subr.bf16.mxu0 %v294
  %387 = vmatpush1.bf16.msra.mxu0 %v293
  %388 = vmatprep.subr.bf16.mxu0 %v292
  %389 = vmatpush1.bf16.msra.mxu0 %v291
  %390 = vmatprep.subr.bf16.mxu0 0
  %391 = vmatpush2.bf16.msra.mxu0 0
  %392 = vmatprep.subr.bf16.mxu0 0
  %393 = vmatpush2.bf16.msra.mxu0 0
  %394 = vmatprep.subr.bf16.mxu0 0
  %395 = vmatpush2.bf16.msra.mxu0 0
  %396 = vmatprep.subr.bf16.mxu0 0
  %397 = vmatpush2.bf16.msra.mxu0 0
  %398 = vmatprep.subr.bf16.mxu0 0
  %399 = vmatpush2.bf16.msra.mxu0 0
  %400 = vmatprep.subr.bf16.mxu0 0
  %401 = vmatpush2.bf16.msra.mxu0 0
  %402 = vmatprep.subr.bf16.mxu0 %v310
  %403 = vmatpush2.bf16.msra.mxu0 %v309
  %404 = vmatprep.subr.bf16.mxu0 %v308
  %405 = vmatpush2.bf16.msra.mxu0 %v307
  %406 = vmatprep.mubr.bf16.mxu0 %v333
  %407 = vmatmul.mubr.bf16.gmra.mxu0 %v189
  %v408 = vpop.f32.mrf.mxu0
  %v409 = vadd.f32 %v98, %v408
  %v410 = vpop.f32.mrf.mxu0
  %v411 = vadd.f32 %v102, %v410
  %v412 = vpop.f32.mrf.mxu0
  %v413 = vadd.f32 %v98, %v412
  %v414 = vpop.f32.mrf.mxu0
  %v415 = vadd.f32 %v102, %v414
  %416 = vmatprep.mubr.bf16.mxu0 %v336
  %417 = vmatmul.mubr.bf16.gmra.mxu0 %v191
  %v418 = vpop.f32.mrf.mxu0
  %v419 = vadd.f32 %v98, %v418
  %v420 = vpop.f32.mrf.mxu0
  %v421 = vadd.f32 %v102, %v420
  %v422 = vpop.f32.mrf.mxu0
  %v423 = vadd.f32 %v98, %v422
  %v424 = vpop.f32.mrf.mxu0
  %v425 = vadd.f32 %v102, %v424
  %426 = vmatprep.mubr.bf16.mxu0 %v339
  %427 = vmatmul.mubr.bf16.gmra.mxu0 %v193
  %v428 = vpop.f32.mrf.mxu0
  %v429 = vadd.f32 %v98, %v428
  %v430 = vpop.f32.mrf.mxu0
  %v431 = vadd.f32 %v102, %v430
  %v432 = vpop.f32.mrf.mxu0
  %v433 = vadd.f32 %v98, %v432
  %v434 = vpop.f32.mrf.mxu0
  %v435 = vadd.f32 %v102, %v434
  %436 = vmatprep.mubr.bf16.mxu0 %v342
  %437 = vmatmul.mubr.bf16.gmra.mxu0 %v195
  %v438 = vpop.f32.mrf.mxu0
  %v439 = vadd.f32 %v98, %v438
  %v440 = vpop.f32.mrf.mxu0
  %v441 = vadd.f32 %v102, %v440
  %v442 = vpop.f32.mrf.mxu0
  %v443 = vadd.f32 %v98, %v442
  %v444 = vpop.f32.mrf.mxu0
  %v445 = vadd.f32 %v102, %v444
  %446 = vmatprep.mubr.bf16.mxu0 %v345
  %447 = vmatmul.mubr.bf16.gmra.mxu0 %v197
  %v448 = vpop.f32.mrf.mxu0
  %v449 = vadd.f32 %v98, %v448
  %v450 = vpop.f32.mrf.mxu0
  %v451 = vadd.f32 %v102, %v450
  %v452 = vpop.f32.mrf.mxu0
  %v453 = vadd.f32 %v98, %v452
  %v454 = vpop.f32.mrf.mxu0
  %v455 = vadd.f32 %v102, %v454
  %456 = vmatprep.mubr.bf16.mxu0 %v348
  %457 = vmatmul.mubr.bf16.gmra.mxu0 %v199
  %v458 = vpop.f32.mrf.mxu0
  %v459 = vadd.f32 %v98, %v458
  %v460 = vpop.f32.mrf.mxu0
  %v461 = vadd.f32 %v102, %v460
  %v462 = vpop.f32.mrf.mxu0
  %v463 = vadd.f32 %v98, %v462
  %v464 = vpop.f32.mrf.mxu0
  %v465 = vadd.f32 %v102, %v464
  %466 = vmatprep.mubr.bf16.mxu0 %v351
  %467 = vmatmul.mubr.bf16.gmra.mxu0 %v201
  %v468 = vpop.f32.mrf.mxu0
  %v469 = vadd.f32 %v98, %v468
  %v470 = vpop.f32.mrf.mxu0
  %v471 = vadd.f32 %v102, %v470
  %v472 = vpop.f32.mrf.mxu0
  %v473 = vadd.f32 %v98, %v472
  %v474 = vpop.f32.mrf.mxu0
  %v475 = vadd.f32 %v102, %v474
  %476 = vmatprep.mubr.bf16.mxu0 %v354
  %477 = vmatmul.mubr.bf16.gmra.mxu0 %v203
  %v478 = vpop.f32.mrf.mxu0
  %v479 = vadd.f32 %v98, %v478
  %v480 = vpop.f32.mrf.mxu0
  %v481 = vadd.f32 %v102, %v480
  %v482 = vpop.f32.mrf.mxu0
  %v483 = vadd.f32 %v98, %v482
  %v484 = vpop.f32.mrf.mxu0
  %v485 = vadd.f32 %v102, %v484
  %486 = vmatprep.mubr.bf16.mxu0 %v357
  %487 = vmatmul.mubr.bf16.gmra.mxu0 %v205
  %v488 = vpop.f32.mrf.mxu0
  %v489 = vadd.f32 %v98, %v488
  %v490 = vpop.f32.mrf.mxu0
  %v491 = vadd.f32 %v102, %v490
  %v492 = vpop.f32.mrf.mxu0
  %v493 = vadd.f32 %v98, %v492
  %v494 = vpop.f32.mrf.mxu0
  %v495 = vadd.f32 %v102, %v494
  %496 = vmatprep.mubr.bf16.mxu0 %v360
  %497 = vmatmul.mubr.bf16.gmra.mxu0 %v207
  %v498 = vpop.f32.mrf.mxu0
  %v499 = vadd.f32 %v98, %v498
  %v500 = vpop.f32.mrf.mxu0
  %v501 = vadd.f32 %v102, %v500
  %v502 = vpop.f32.mrf.mxu0
  %v503 = vadd.f32 %v98, %v502
  %v504 = vpop.f32.mrf.mxu0
  %v505 = vadd.f32 %v102, %v504
  %506 = vmatprep.mubr.bf16.mxu0 %v363
  %507 = vmatmul.mubr.bf16.gmra.mxu0 %v209
  %v508 = vpop.f32.mrf.mxu0
  %v509 = vadd.f32 %v98, %v508
  %v510 = vpop.f32.mrf.mxu0
  %v511 = vadd.f32 %v102, %v510
  %v512 = vpop.f32.mrf.mxu0
  %v513 = vadd.f32 %v98, %v512
  %v514 = vpop.f32.mrf.mxu0
  %v515 = vadd.f32 %v102, %v514
  %516 = vmatprep.mubr.bf16.mxu0 %v366
  %517 = vmatmul.mubr.bf16.gmra.mxu0 %v211
  %v518 = vpop.f32.mrf.mxu0
  %v519 = vadd.f32 %v98, %v518
  %v520 = vpop.f32.mrf.mxu0
  %v521 = vadd.f32 %v102, %v520
  %v522 = vpop.f32.mrf.mxu0
  %v523 = vadd.f32 %v98, %v522
  %v524 = vpop.f32.mrf.mxu0
  %v525 = vadd.f32 %v102, %v524
  %526 = vmatprep.mubr.bf16.mxu0 %v369
  %527 = vmatmul.mubr.bf16.gmra.mxu0 %v213
  %v528 = vpop.f32.mrf.mxu0
  %v529 = vadd.f32 %v98, %v528
  %v530 = vpop.f32.mrf.mxu0
  %v531 = vadd.f32 %v102, %v530
  %v532 = vpop.f32.mrf.mxu0
  %v533 = vadd.f32 %v98, %v532
  %v534 = vpop.f32.mrf.mxu0
  %v535 = vadd.f32 %v102, %v534
  %536 = vmatprep.mubr.bf16.mxu0 %v372
  %537 = vmatmul.mubr.bf16.gmra.mxu0 %v215
  %v538 = vpop.f32.mrf.mxu0
  %v539 = vadd.f32 %v98, %v538
  %v540 = vpop.f32.mrf.mxu0
  %v541 = vadd.f32 %v102, %v540
  %v542 = vpop.f32.mrf.mxu0
  %v543 = vadd.f32 %v98, %v542
  %v544 = vpop.f32.mrf.mxu0
  %v545 = vadd.f32 %v102, %v544
  %546 = vdwg.mxu0
  %v547 = vtanh.pop %v409
  %v548 = vtanh.pop %v411
  %v549 = vtanh.pop %v413
  %v550 = vtanh.pop %v415
  %v551 = vtanh.pop %v419
  %v552 = vtanh.pop %v421
  %v553 = vtanh.pop %v423
  %v554 = vtanh.pop %v425
  %v555 = vtanh.pop %v429
  %v556 = vtanh.pop %v431
  %v557 = vtanh.pop %v433
  %v558 = vtanh.pop %v435
  %v559 = vtanh.pop %v439
  %v560 = vtanh.pop %v441
  %v561 = vtanh.pop %v443
  %v562 = vtanh.pop %v445
  %v563 = vtanh.pop %v449
  %v564 = vtanh.pop %v451
  %v565 = vtanh.pop %v453
  %v566 = vtanh.pop %v455
  %v567 = vtanh.pop %v459
  %v568 = vtanh.pop %v461
  %v569 = vtanh.pop %v463
  %v570 = vtanh.pop %v465
  %v571 = vtanh.pop %v469
  %v572 = vtanh.pop %v471
  %v573 = vtanh.pop %v473
  %v574 = vtanh.pop %v475
  %v575 = vtanh.pop %v479
  %v576 = vtanh.pop %v481
  %v577 = vtanh.pop %v483
  %v578 = vtanh.pop %v485
  %v579 = vtanh.pop %v489
  %v580 = vtanh.pop %v491
  %v581 = vtanh.pop %v493
  %v582 = vtanh.pop %v495
  %v583 = vtanh.pop %v499
  %v584 = vtanh.pop %v501
  %v585 = vtanh.pop %v503
  %v586 = vtanh.pop %v505
  %v587 = vtanh.pop %v509
  %v588 = vtanh.pop %v511
  %v589 = vtanh.pop %v513
  %v590 = vtanh.pop %v515
  %v591 = vtanh.pop %v519
  %v592 = vtanh.pop %v521
  %v593 = vtanh.pop %v523
  %v594 = vtanh.pop %v525
  %v595 = vtanh.pop %v529
  %v596 = vtanh.pop %v531
  %v597 = vtanh.pop %v533
  %v598 = vtanh.pop %v535
  %v599 = vtanh.pop %v539
  %v600 = vtanh.pop %v541
  %v601 = vtanh.pop %v543
  %v602 = vtanh.pop %v545
  %v603 = vadd.f32 %v547, %v549
  %v604 = vadd.f32 %v548, %v550
  %v605 = vadd.f32 %v551, %v553
  %v606 = vadd.f32 %v552, %v554
  %v607 = vadd.f32 %v555, %v557
  %v608 = vadd.f32 %v556, %v558
  %v609 = vadd.f32 %v559, %v561
  %v610 = vadd.f32 %v560, %v562
  %v611 = vadd.f32 %v563, %v565
  %v612 = vadd.f32 %v564, %v566
  %v613 = vadd.f32 %v567, %v569
  %v614 = vadd.f32 %v568, %v570
  %v615 = vadd.f32 %v571, %v573
  %v616 = vadd.f32 %v572, %v574
  %v617 = vadd.f32 %v575, %v577
  %v618 = vadd.f32 %v576, %v578
  %v619 = vadd.f32 %v579, %v581
  %v620 = vadd.f32 %v580, %v582
  %v621 = vadd.f32 %v583, %v585
  %v622 = vadd.f32 %v584, %v586
  %v623 = vadd.f32 %v587, %v589
  %v624 = vadd.f32 %v588, %v590
  %v625 = vadd.f32 %v591, %v593
  %v626 = vadd.f32 %v592, %v594
  %v627 = vadd.f32 %v595, %v597
  %v628 = vadd.f32 %v596, %v598
  %v629 = vadd.f32 %v599, %v601
  %v630 = vadd.f32 %v600, %v602
  %v631 = vmul.f32 %v603, 0.5
  %v632 = vmul.f32 %v604, 0.5
  %v633 = vmul.f32 %v605, 0.5
  %v634 = vmul.f32 %v606, 0.5
  %v635 = vmul.f32 %v607, 0.5
  %v636 = vmul.f32 %v608, 0.5
  %v637 = vmul.f32 %v609, 0.5
  %v638 = vmul.f32 %v610, 0.5
  %v639 = vmul.f32 %v611, 0.5
  %v640 = vmul.f32 %v612, 0.5
  %v641 = vmul.f32 %v613, 0.5
  %v642 = vmul.f32 %v614, 0.5
  %v643 = vmul.f32 %v615, 0.5
  %v644 = vmul.f32 %v616, 0.5
  %v645 = vmul.f32 %v617, 0.5
  %v646 = vmul.f32 %v618, 0.5
  %v647 = vmul.f32 %v619, 0.5
  %v648 = vmul.f32 %v620, 0.5
  %v649 = vmul.f32 %v621, 0.5
  %v650 = vmul.f32 %v622, 0.5
  %v651 = vmul.f32 %v623, 0.5
  %v652 = vmul.f32 %v624, 0.5
  %v653 = vmul.f32 %v625, 0.5
  %v654 = vmul.f32 %v626, 0.5
  %v655 = vmul.f32 %v627, 0.5
  %v656 = vmul.f32 %v628, 0.5
  %v657 = vmul.f32 %v629, 0.5
  %v658 = vmul.f32 %v630, 0.5
  %v659 = vpack.c.bf16 %v633, %v631
  %v660 = vpack.c.bf16 %v634, %v632
  %v661 = vpack.c.bf16 %v637, %v635
  %v662 = vpack.c.bf16 %v638, %v636
  %v663 = vpack.c.bf16 %v641, %v639
  %v664 = vpack.c.bf16 %v642, %v640
  %v665 = vpack.c.bf16 %v645, %v643
  %v666 = vpack.c.bf16 %v646, %v644
  %v667 = vpack.c.bf16 %v649, %v647
  %v668 = vpack.c.bf16 %v650, %v648
  %v669 = vpack.c.bf16 %v653, %v651
  %v670 = vpack.c.bf16 %v654, %v652
  %v671 = vpack.c.bf16 %v657, %v655
  %v672 = vpack.c.bf16 %v658, %v656
  %v673 = vld [vmem:[%s3] sm:$0xf]
  %v674 = vld [vmem:[%s3 + $0x4] sm:$0xf]
  %v675 = vld [vmem:[%s3 + $0x8] sm:$0xf]
  %v676 = vld [vmem:[%s3 + $0xc] sm:$0xf]
  %v677 = vld [vmem:[%s3 + $0x10] sm:$0xf]
  %v678 = vld [vmem:[%s3 + $0x14] sm:$0xf]
  %v679 = vld [vmem:[%s3 + $0x18] sm:$0xf]
  %v680 = vld [vmem:[%s3 + $0x1c] sm:$0xf]
  %v681 = vld [vmem:[%s3 + $0x20] sm:$0xf]
  %v682 = vld [vmem:[%s3 + $0x24] sm:$0xf]
  %v683 = vld [vmem:[%s3 + $0x28] sm:$0xf]
  %v684 = vld [vmem:[%s3 + $0x2c] sm:$0xf]
  %v685 = vld [vmem:[%s3 + $0x30] sm:$0xf]
  %v686 = vld [vmem:[%s3 + $0x34] sm:$0xf]
  %v687 = vld [vmem:[%s3 + $0x38] sm:$0xf]
  %v688 = vld [vmem:[%s3 + $0x3c] sm:$0xf]
  %v689 = vld [vmem:[%s3 + $0x40] sm:$0xf]
  %v690 = vld [vmem:[%s3 + $0x44] sm:$0xf]
  %v691 = vld [vmem:[%s3 + $0x48] sm:$0xf]
  %v692 = vld [vmem:[%s3 + $0x4c] sm:$0xf]
  %v693 = vld [vmem:[%s3 + $0x50] sm:$0xf]
  %v715 = vunpack.c.l.b16 %v673
  %v716 = vunpack.c.l.b16 %v674
  %v717 = vunpack.c.l.b16 %v675
  %v718 = vunpack.c.l.b16 %v676
  %v719 = vunpack.c.l.b16 %v677
  %v720 = vunpack.c.l.b16 %v678
  %v721 = vunpack.c.l.b16 %v679
  %v722 = vunpack.c.l.b16 %v680
  %v723 = vunpack.c.l.b16 %v681
  %v724 = vunpack.c.l.b16 %v682
  %v725 = vunpack.c.l.b16 %v683
  %v726 = vunpack.c.l.b16 %v684
  %v727 = vunpack.c.l.b16 %v685
  %v728 = vunpack.c.l.b16 %v686
  %v729 = vunpack.c.l.b16 %v687
  %v730 = vunpack.c.l.b16 %v688
  %v731 = vunpack.c.l.b16 %v689
  %v732 = vunpack.c.l.b16 %v690
  %v733 = vunpack.c.l.b16 %v691
  %v734 = vunpack.c.l.b16 %v692
  %v735 = vunpack.c.l.b16 %v693
  %v736 = vpack.c.b16 %v716, %v715
  %v737 = vpack.c.b16 %v718, %v717
  %v738 = vpack.c.b16 %v720, %v719
  %v739 = vpack.c.b16 %v722, %v721
  %v740 = vpack.c.b16 %v724, %v723
  %v741 = vpack.c.b16 %v726, %v725
  %v742 = vpack.c.b16 %v728, %v727
  %v743 = vpack.c.b16 %v730, %v729
  %v744 = vpack.c.b16 %v732, %v731
  %v745 = vpack.c.b16 %v734, %v733
  %v746 = vpack.c.b16 %v735, %v735
  %vm757 = vcmask 326656
  %v759 = vsel %vm757, %v660, 0
  %v762 = vsel %vm757, %v662, 0
  %v765 = vsel %vm757, %v664, 0
  %v768 = vsel %vm757, %v666, 0
  %v771 = vsel %vm757, %v668, 0
  %v774 = vsel %vm757, %v670, 0
  %v777 = vsel %vm757, %v672, 0
  %vm779 = vcmask 1043456
  %v781 = vsel %vm779, %v746, 0
  %783 = vmatprep.subr.bf16.mxu0 0
  %784 = vmatpush1.bf16.msra.mxu0 %v743
  %785 = vmatprep.subr.bf16.mxu0 0
  %786 = vmatpush1.bf16.msra.mxu0 %v742
  %787 = vmatprep.subr.bf16.mxu0 0
  %788 = vmatpush1.bf16.msra.mxu0 %v741
  %789 = vmatprep.subr.bf16.mxu0 0
  %790 = vmatpush1.bf16.msra.mxu0 %v740
  %791 = vmatprep.subr.bf16.mxu0 0
  %792 = vmatpush1.bf16.msra.mxu0 %v739
  %793 = vmatprep.subr.bf16.mxu0 0
  %794 = vmatpush1.bf16.msra.mxu0 %v738
  %795 = vmatprep.subr.bf16.mxu0 0
  %796 = vmatpush1.bf16.msra.mxu0 %v737
  %797 = vmatprep.subr.bf16.mxu0 0
  %798 = vmatpush1.bf16.msra.mxu0 %v736
  %799 = vmatprep.subr.bf16.mxu0 0
  %800 = vmatpush2.bf16.msra.mxu0 0
  %801 = vmatprep.subr.bf16.mxu0 0
  %802 = vmatpush2.bf16.msra.mxu0 0
  %803 = vmatprep.subr.bf16.mxu0 0
  %804 = vmatpush2.bf16.msra.mxu0 0
  %805 = vmatprep.subr.bf16.mxu0 0
  %806 = vmatpush2.bf16.msra.mxu0 0
  %807 = vmatprep.subr.bf16.mxu0 0
  %808 = vmatpush2.bf16.msra.mxu0 0
  %809 = vmatprep.subr.bf16.mxu0 0
  %810 = vmatpush2.bf16.msra.mxu0 %v781
  %811 = vmatprep.subr.bf16.mxu0 0
  %812 = vmatpush2.bf16.msra.mxu0 %v745
  %813 = vmatprep.subr.bf16.mxu0 0
  %814 = vmatpush2.bf16.msra.mxu0 %v744
  %815 = vmatprep.mubr.bf16.mxu0 %v759
  %816 = vmatmul.mubr.bf16.gmra.mxu0 %v659
  %v817 = vpop.f32.mrf.mxu0
  %v818 = vadd.f32 0.0, %v817
  %v819 = vpop.f32.mrf.mxu0
  %v820 = vpop.f32.mrf.mxu0
  %v821 = vadd.f32 0.0, %v820
  %v822 = vpop.f32.mrf.mxu0
  %823 = vmatprep.mubr.bf16.mxu0 %v762
  %824 = vmatmul.mubr.bf16.gmra.mxu0 %v661
  %v825 = vpop.f32.mrf.mxu0
  %v826 = vadd.f32 0.0, %v825
  %v827 = vpop.f32.mrf.mxu0
  %v828 = vpop.f32.mrf.mxu0
  %v829 = vadd.f32 0.0, %v828
  %v830 = vpop.f32.mrf.mxu0
  %831 = vmatprep.mubr.bf16.mxu0 %v765
  %832 = vmatmul.mubr.bf16.gmra.mxu0 %v663
  %v833 = vpop.f32.mrf.mxu0
  %v834 = vadd.f32 0.0, %v833
  %v835 = vpop.f32.mrf.mxu0
  %v836 = vpop.f32.mrf.mxu0
  %v837 = vadd.f32 0.0, %v836
  %v838 = vpop.f32.mrf.mxu0
  %839 = vmatprep.mubr.bf16.mxu0 %v768
  %840 = vmatmul.mubr.bf16.gmra.mxu0 %v665
  %v841 = vpop.f32.mrf.mxu0
  %v842 = vadd.f32 0.0, %v841
  %v843 = vpop.f32.mrf.mxu0
  %v844 = vpop.f32.mrf.mxu0
  %v845 = vadd.f32 0.0, %v844
  %v846 = vpop.f32.mrf.mxu0
  %847 = vmatprep.mubr.bf16.mxu0 %v771
  %848 = vmatmul.mubr.bf16.gmra.mxu0 %v667
  %v849 = vpop.f32.mrf.mxu0
  %v850 = vadd.f32 0.0, %v849
  %v851 = vpop.f32.mrf.mxu0
  %v852 = vpop.f32.mrf.mxu0
  %v853 = vadd.f32 0.0, %v852
  %v854 = vpop.f32.mrf.mxu0
  %855 = vmatprep.mubr.bf16.mxu0 %v774
  %856 = vmatmul.mubr.bf16.gmra.mxu0 %v669
  %v857 = vpop.f32.mrf.mxu0
  %v858 = vadd.f32 0.0, %v857
  %v859 = vpop.f32.mrf.mxu0
  %v860 = vpop.f32.mrf.mxu0
  %v861 = vadd.f32 0.0, %v860
  %v862 = vpop.f32.mrf.mxu0
  %863 = vmatprep.mubr.bf16.mxu0 %v777
  %864 = vmatmul.mubr.bf16.gmra.mxu0 %v671
  %v865 = vpop.f32.mrf.mxu0
  %v866 = vadd.f32 0.0, %v865
  %v867 = vpop.f32.mrf.mxu0
  %v868 = vpop.f32.mrf.mxu0
  %v869 = vadd.f32 0.0, %v868
  %v870 = vpop.f32.mrf.mxu0
  %871 = vdwg.mxu0
  %v872 = vpack.c.bf16 %v821, %v818
  %v873 = vpack.c.bf16 %v829, %v826
  %v874 = vpack.c.bf16 %v837, %v834
  %v875 = vpack.c.bf16 %v845, %v842
  %v876 = vpack.c.bf16 %v853, %v850
  %v877 = vpack.c.bf16 %v861, %v858
  %v878 = vpack.c.bf16 %v869, %v866
  %v884 = vunpack.c.l.b16 %v872
  %v885 = vunpack.c.h.b16 %v872
  %v886 = vunpack.c.l.b16 %v873
  %v887 = vunpack.c.h.b16 %v873
  %v888 = vunpack.c.l.b16 %v874
  %v889 = vunpack.c.h.b16 %v874
  %v890 = vunpack.c.l.b16 %v875
  %v891 = vunpack.c.h.b16 %v875
  %v892 = vunpack.c.l.b16 %v876
  %v893 = vunpack.c.h.b16 %v876
  %v894 = vpack.c.b16 %v884, %v884
  %v895 = vpack.c.b16 %v885, %v885
  %v896 = vpack.c.b16 %v886, %v886
  %v897 = vpack.c.b16 %v887, %v887
  %v898 = vpack.c.b16 %v888, %v888
  %v899 = vpack.c.b16 %v889, %v889
  %v900 = vpack.c.b16 %v890, %v890
  %v901 = vpack.c.b16 %v891, %v891
  %v902 = vpack.c.b16 %v892, %v892
  %v903 = vpack.c.b16 %v893, %v893
  %914 = vst [vmem:[#allocation2] sm:$0xf] %v894
  %915 = vst [vmem:[#allocation2 + $0x14] sm:$0xf] %v895
  %916 = vst [vmem:[#allocation2 + $0x28] sm:$0xf] %v896
  %917 = vst [vmem:[#allocation2 + $0x3c] sm:$0xf] %v897
  %918 = vst [vmem:[#allocation2 + $0x50] sm:$0xf] %v898
  %919 = vst [vmem:[#allocation2 + $0x64] sm:$0xf] %v899
  %920 = vst [vmem:[#allocation2 + $0x78] sm:$0xf] %v900
  %921 = vst [vmem:[#allocation2 + $0x8c] sm:$0xf] %v901
  %922 = vst [vmem:[#allocation2 + $0xa0] sm:$0xf] %v902
  %923 = vst [vmem:[#allocation2 + $0xb4] sm:$0xf] %v903
  %v925 = vunpack.c.l.b16 %v877
  %v926 = vpack.c.b16 %v925, %v925
  %928 = vst [vmem:[#allocation2 + $0x4] sm:$0xf] %v895
  %929 = vst [vmem:[#allocation2 + $0x18] sm:$0xf] %v896
  %930 = vst [vmem:[#allocation2 + $0x2c] sm:$0xf] %v897
  %931 = vst [vmem:[#allocation2 + $0x40] sm:$0xf] %v898
  %932 = vst [vmem:[#allocation2 + $0x54] sm:$0xf] %v899
  %933 = vst [vmem:[#allocation2 + $0x68] sm:$0xf] %v900
  %934 = vst [vmem:[#allocation2 + $0x7c] sm:$0xf] %v901
  %935 = vst [vmem:[#allocation2 + $0x90] sm:$0xf] %v902
  %936 = vst [vmem:[#allocation2 + $0xa4] sm:$0xf] %v903
  %937 = vst [vmem:[#allocation2 + $0xb8] sm:$0xf] %v926
  %v938 = vunpack.c.h.b16 %v877
  %v939 = vpack.c.b16 %v938, %v938
  %941 = vst [vmem:[#allocation2 + $0x8] sm:$0xf] %v896
  %942 = vst [vmem:[#allocation2 + $0x1c] sm:$0xf] %v897
  %943 = vst [vmem:[#allocation2 + $0x30] sm:$0xf] %v898
  %944 = vst [vmem:[#allocation2 + $0x44] sm:$0xf] %v899
  %945 = vst [vmem:[#allocation2 + $0x58] sm:$0xf] %v900
  %946 = vst [vmem:[#allocation2 + $0x6c] sm:$0xf] %v901
  %947 = vst [vmem:[#allocation2 + $0x80] sm:$0xf] %v902
  %948 = vst [vmem:[#allocation2 + $0x94] sm:$0xf] %v903
  %949 = vst [vmem:[#allocation2 + $0xa8] sm:$0xf] %v926
  %950 = vst [vmem:[#allocation2 + $0xbc] sm:$0xf] %v939
  %v952 = vunpack.c.l.b16 %v878
  %v953 = vpack.c.b16 %v952, %v952
  %955 = vst [vmem:[#allocation2 + $0xc] sm:$0xf] %v897
  %956 = vst [vmem:[#allocation2 + $0x20] sm:$0xf] %v898
  %957 = vst [vmem:[#allocation2 + $0x34] sm:$0xf] %v899
  %958 = vst [vmem:[#allocation2 + $0x48] sm:$0xf] %v900
  %959 = vst [vmem:[#allocation2 + $0x5c] sm:$0xf] %v901
  %960 = vst [vmem:[#allocation2 + $0x70] sm:$0xf] %v902
  %961 = vst [vmem:[#allocation2 + $0x84] sm:$0xf] %v903
  %962 = vst [vmem:[#allocation2 + $0x98] sm:$0xf] %v926
  %963 = vst [vmem:[#allocation2 + $0xac] sm:$0xf] %v939
  %964 = vst [vmem:[#allocation2 + $0xc0] sm:$0xf] %v953
  %v965 = vunpack.c.h.b16 %v878
  %v966 = vpack.c.b16 %v965, %v965
  %968 = vst [vmem:[#allocation2 + $0x10] sm:$0xf] %v898
  %969 = vst [vmem:[#allocation2 + $0x24] sm:$0xf] %v899
  %970 = vst [vmem:[#allocation2 + $0x38] sm:$0xf] %v900
  %971 = vst [vmem:[#allocation2 + $0x4c] sm:$0xf] %v901
  %972 = vst [vmem:[#allocation2 + $0x60] sm:$0xf] %v902
  %973 = vst [vmem:[#allocation2 + $0x74] sm:$0xf] %v903
  %974 = vst [vmem:[#allocation2 + $0x88] sm:$0xf] %v926
  %975 = vst [vmem:[#allocation2 + $0x9c] sm:$0xf] %v939
  %976 = vst [vmem:[#allocation2 + $0xb0] sm:$0xf] %v953
  %977 = vst [vmem:[#allocation2 + $0xc4] sm:$0xf] %v966
  %v978 = vld [vmem:[#allocation2] sm:$0xff]
  %v979 = vld [vmem:[#allocation2 + $0x8] sm:$0xff]
  %v980 = vld [vmem:[#allocation2 + $0x10] sm:$0xf]
  %v981 = vld [vmem:[#allocation2 + $0x14] sm:$0xff]
  %v982 = vld [vmem:[#allocation2 + $0x1c] sm:$0xff]
  %v983 = vld [vmem:[#allocation2 + $0x24] sm:$0xf]
  %v984 = vld [vmem:[#allocation2 + $0x28] sm:$0xff]
  %v985 = vld [vmem:[#allocation2 + $0x30] sm:$0xff]
  %v986 = vld [vmem:[#allocation2 + $0x38] sm:$0xf]
  %v987 = vld [vmem:[#allocation2 + $0x3c] sm:$0xff]
  %v988 = vld [vmem:[#allocation2 + $0x44] sm:$0xff]
  %v989 = vld [vmem:[#allocation2 + $0x4c] sm:$0xf]
  %v990 = vld [vmem:[#allocation2 + $0x50] sm:$0xff]
  %v991 = vld [vmem:[#allocation2 + $0x58] sm:$0xff]
  %v992 = vld [vmem:[#allocation2 + $0x60] sm:$0xf]
  %v993 = vld [vmem:[#allocation2 + $0x64] sm:$0xff]
  %v994 = vld [vmem:[#allocation2 + $0x6c] sm:$0xff]
  %v995 = vld [vmem:[#allocation2 + $0x74] sm:$0xf]
  %v996 = vld [vmem:[#allocation2 + $0x78] sm:$0xff]
  %v997 = vld [vmem:[#allocation2 + $0x80] sm:$0xff]
  %v998 = vld [vmem:[#allocation2 + $0x88] sm:$0xf]
  %v999 = vld [vmem:[#allocation2 + $0x8c] sm:$0xff]
  %v1000 = vld [vmem:[#allocation2 + $0x94] sm:$0xff]
  %v1001 = vld [vmem:[#allocation2 + $0x9c] sm:$0xf]
  %v1002 = vld [vmem:[#allocation2 + $0xa0] sm:$0xff]
  %v1003 = vld [vmem:[#allocation2 + $0xa8] sm:$0xff]
  %v1004 = vld [vmem:[#allocation2 + $0xb0] sm:$0xf]
  %v1005 = vld [vmem:[#allocation2 + $0xb4] sm:$0xff]
  %v1006 = vld [vmem:[#allocation2 + $0xbc] sm:$0xff]
  %v1007 = vld [vmem:[#allocation2 + $0xc4] sm:$0xf]
  %v1008 = vld [vmem:[%s4] sm:$0xff]
  %v1009 = vld [vmem:[%s4 + $0x8] sm:$0xff]
  %v1010 = vld [vmem:[%s4 + $0x10] sm:$0xff]
  %v1011 = vld [vmem:[%s4 + $0x18] sm:$0xff]
  %v1012 = vld [vmem:[%s4 + $0x20] sm:$0xff]
  %v1013 = vld [vmem:[%s4 + $0x28] sm:$0xff]
  %v1014 = vld [vmem:[%s4 + $0x30] sm:$0xff]
  %v1015 = vld [vmem:[%s4 + $0x38] sm:$0xff]
  %v1016 = vld [vmem:[%s4 + $0x40] sm:$0xff]
  %v1017 = vld [vmem:[%s4 + $0x48] sm:$0xff]
  %v1018 = vld [vmem:[%s4 + $0x50] sm:$0xff]
  %v1019 = vld [vmem:[%s4 + $0x58] sm:$0xff]
  %v1020 = vld [vmem:[%s4 + $0x60] sm:$0xff]
  %v1021 = vld [vmem:[%s4 + $0x68] sm:$0xff]
  %v1022 = vld [vmem:[%s4 + $0x70] sm:$0xff]
  %v1023 = vld [vmem:[%s4 + $0x78] sm:$0xff]
  %v1024 = vld [vmem:[%s4 + $0x80] sm:$0xff]
  %v1025 = vld [vmem:[%s4 + $0x88] sm:$0xff]
  %v1026 = vld [vmem:[%s4 + $0x90] sm:$0xff]
  %v1027 = vld [vmem:[%s4 + $0x98] sm:$0xff]
  %v1028 = vld [vmem:[%s4 + $0xa0] sm:$0xff]
  %v1029 = vld [vmem:[%s4 + $0xa8] sm:$0xff]
  %v1030 = vld [vmem:[%s4 + $0xb0] sm:$0xff]
  %v1031 = vld [vmem:[%s4 + $0xb8] sm:$0xff]
  %v1032 = vld [vmem:[%s4 + $0xc0] sm:$0xff]
  %v1033 = vld [vmem:[%s4 + $0xc8] sm:$0xff]
  %v1034 = vld [vmem:[%s4 + $0xd0] sm:$0xff]
  %v1035 = vld [vmem:[%s4 + $0xd8] sm:$0xff]
  %v1036 = vld [vmem:[%s4 + $0xe0] sm:$0xff]
  %v1037 = vld [vmem:[%s4 + $0xe8] sm:$0xff]
  %v1038 = vld [vmem:[%s4 + $0xf0] sm:$0xff]
  %v1039 = vld [vmem:[%s4 + $0xf8] sm:$0xff]
  %v1040 = vld [vmem:[%s4 + $0x100] sm:$0xff]
  %v1041 = vld [vmem:[%s4 + $0x108] sm:$0xff]
  %v1042 = vld [vmem:[%s4 + $0x110] sm:$0xff]
  %v1043 = vld [vmem:[%s4 + $0x118] sm:$0xff]
  %v1044 = vld [vmem:[%s4 + $0x120] sm:$0xff]
  %v1045 = vld [vmem:[%s4 + $0x128] sm:$0xff]
  %v1046 = vld [vmem:[%s4 + $0x130] sm:$0xff]
  %v1047 = vld [vmem:[%s4 + $0x138] sm:$0xff]
  %v1048 = vld [vmem:[%s4 + $0x140] sm:$0xff]
  %v1049 = vld [vmem:[%s4 + $0x148] sm:$0xff]
  %v1050 = vld [vmem:[%s4 + $0x150] sm:$0xff]
  %v1051 = vld [vmem:[%s4 + $0x158] sm:$0xff]
  %v1052 = vld [vmem:[%s4 + $0x160] sm:$0xff]
  %v1053 = vld [vmem:[%s4 + $0x168] sm:$0xff]
  %v1054 = vld [vmem:[%s4 + $0x170] sm:$0xff]
  %v1055 = vld [vmem:[%s4 + $0x178] sm:$0xff]
  %v1056 = vld [vmem:[%s4 + $0x180] sm:$0xff]
  %v1057 = vld [vmem:[%s4 + $0x188] sm:$0xff]
  %v1058 = vld [vmem:[%s4 + $0x190] sm:$0xff]
  %v1059 = vld [vmem:[%s4 + $0x198] sm:$0xff]
  %v1060 = vld [vmem:[%s4 + $0x1a0] sm:$0xff]
  %v1061 = vld [vmem:[%s4 + $0x1a8] sm:$0xff]
  %v1062 = vld [vmem:[%s4 + $0x1b0] sm:$0xff]
  %v1063 = vld [vmem:[%s4 + $0x1b8] sm:$0xff]
  %v1064 = vld [vmem:[%s4 + $0x1c0] sm:$0xff]
  %v1065 = vld [vmem:[%s4 + $0x1c8] sm:$0xff]
  %v1066 = vld [vmem:[%s4 + $0x1d0] sm:$0xff]
  %v1067 = vld [vmem:[%s4 + $0x1d8] sm:$0xff]
  %v1068 = vld [vmem:[%s4 + $0x1e0] sm:$0xff]
  %v1069 = vld [vmem:[%s4 + $0x1e8] sm:$0xff]
  %v1070 = vld [vmem:[%s4 + $0x1f0] sm:$0xff]
  %v1071 = vld [vmem:[%s4 + $0x1f8] sm:$0xff]
  %v1072 = vld [vmem:[%s4 + $0x200] sm:$0xff]
  %v1073 = vld [vmem:[%s4 + $0x208] sm:$0xff]
  %v1074 = vld [vmem:[%s4 + $0x210] sm:$0xff]
  %v1075 = vld [vmem:[%s4 + $0x218] sm:$0xff]
  %v1076 = vld [vmem:[%s4 + $0x220] sm:$0xff]
  %v1077 = vld [vmem:[%s4 + $0x228] sm:$0xff]
  %v1078 = vld [vmem:[%s4 + $0x230] sm:$0xff]
  %v1079 = vld [vmem:[%s4 + $0x238] sm:$0xff]
  %v1080 = vld [vmem:[%s4 + $0x240] sm:$0xff]
  %v1081 = vld [vmem:[%s4 + $0x248] sm:$0xff]
  %v1082 = vld [vmem:[%s4 + $0x250] sm:$0xff]
  %v1083 = vld [vmem:[%s4 + $0x258] sm:$0xff]
  %v1084 = vld [vmem:[%s4 + $0x260] sm:$0xff]
  %v1085 = vld [vmem:[%s4 + $0x268] sm:$0xff]
  %v1086 = vld [vmem:[%s4 + $0x270] sm:$0xff]
  %v1087 = vld [vmem:[%s4 + $0x278] sm:$0xff]
  %v1088 = vld [vmem:[%s5] sm:$0x3]
  %v1090 = vlaneseq
  %v1091 = vshrl.u32 %v1090, 7
  %v1092 = vsub.s32 0, %v1091
  %v1093 = vrot.slane %v1088, %v1092
  %v1094 = vlaneseq
  %v1095 = vshrl.u32 %v1094, 7
  %v1096 = vsub.s32 1, %v1095
  %v1097 = vrot.slane %v1088, %v1096
  %v1130 = vunpack.c.l.b16 %v978
  %v1131 = vunpack.c.h.b16 %v978
  %v1132 = vunpack.c.l.b16 %v979
  %v1133 = vunpack.c.h.b16 %v979
  %v1134 = vunpack.c.l.b16 %v980
  %v1135 = vunpack.c.l.b16 %v981
  %v1136 = vunpack.c.h.b16 %v981
  %v1137 = vunpack.c.l.b16 %v982
  %v1138 = vunpack.c.h.b16 %v982
  %v1139 = vunpack.c.l.b16 %v983
  %v1140 = vunpack.c.l.b16 %v984
  %v1141 = vunpack.c.h.b16 %v984
  %v1142 = vunpack.c.l.b16 %v985
  %v1143 = vunpack.c.h.b16 %v985
  %v1144 = vunpack.c.l.b16 %v986
  %v1145 = vunpack.c.l.b16 %v987
  %v1146 = vunpack.c.h.b16 %v987
  %v1147 = vunpack.c.l.b16 %v988
  %v1148 = vunpack.c.h.b16 %v988
  %v1149 = vunpack.c.l.b16 %v989
  %v1150 = vunpack.c.l.b16 %v990
  %v1151 = vunpack.c.h.b16 %v990
  %v1152 = vunpack.c.l.b16 %v991
  %v1153 = vunpack.c.h.b16 %v991
  %v1154 = vunpack.c.l.b16 %v992
  %v1155 = vunpack.c.l.b16 %v993
  %v1156 = vunpack.c.h.b16 %v993
  %v1157 = vunpack.c.l.b16 %v994
  %v1158 = vunpack.c.h.b16 %v994
  %v1159 = vunpack.c.l.b16 %v995
  %v1160 = vunpack.c.l.b16 %v996
  %v1161 = vunpack.c.h.b16 %v996
  %v1162 = vunpack.c.l.b16 %v997
  %v1163 = vunpack.c.h.b16 %v997
  %v1164 = vunpack.c.l.b16 %v998
  %v1165 = vunpack.c.l.b16 %v999
  %v1166 = vunpack.c.h.b16 %v999
  %v1167 = vunpack.c.l.b16 %v1000
  %v1168 = vunpack.c.h.b16 %v1000
  %v1169 = vunpack.c.l.b16 %v1001
  %v1170 = vunpack.c.l.b16 %v1002
  %v1171 = vunpack.c.h.b16 %v1002
  %v1172 = vunpack.c.l.b16 %v1003
  %v1173 = vunpack.c.h.b16 %v1003
  %v1174 = vunpack.c.l.b16 %v1004
  %v1175 = vunpack.c.l.b16 %v1005
  %v1176 = vunpack.c.h.b16 %v1005
  %v1177 = vunpack.c.l.b16 %v1006
  %v1178 = vunpack.c.h.b16 %v1006
  %v1179 = vunpack.c.l.b16 %v1007
  %v1180 = vpack.c.b16 %v1135, %v1130
  %v1181 = vpack.c.b16 %v1136, %v1131
  %v1182 = vpack.c.b16 %v1137, %v1132
  %v1183 = vpack.c.b16 %v1138, %v1133
  %v1184 = vpack.c.b16 %v1139, %v1134
  %v1185 = vpack.c.b16 %v1145, %v1140
  %v1186 = vpack.c.b16 %v1146, %v1141
  %v1187 = vpack.c.b16 %v1147, %v1142
  %v1188 = vpack.c.b16 %v1148, %v1143
  %v1189 = vpack.c.b16 %v1149, %v1144
  %v1190 = vpack.c.b16 %v1155, %v1150
  %v1191 = vpack.c.b16 %v1156, %v1151
  %v1192 = vpack.c.b16 %v1157, %v1152
  %v1193 = vpack.c.b16 %v1158, %v1153
  %v1194 = vpack.c.b16 %v1159, %v1154
  %v1195 = vpack.c.b16 %v1165, %v1160
  %v1196 = vpack.c.b16 %v1166, %v1161
  %v1197 = vpack.c.b16 %v1167, %v1162
  %v1198 = vpack.c.b16 %v1168, %v1163
  %v1199 = vpack.c.b16 %v1169, %v1164
  %v1200 = vpack.c.b16 %v1175, %v1170
  %v1201 = vpack.c.b16 %v1176, %v1171
  %v1202 = vpack.c.b16 %v1177, %v1172
  %v1203 = vpack.c.b16 %v1178, %v1173
  %v1204 = vpack.c.b16 %v1179, %v1174
  %v1310 = vunpack.c.l.b16 %v1008
  %v1311 = vunpack.c.h.b16 %v1008
  %v1312 = vunpack.c.l.b16 %v1009
  %v1313 = vunpack.c.h.b16 %v1009
  %v1314 = vunpack.c.l.b16 %v1010
  %v1315 = vunpack.c.h.b16 %v1010
  %v1316 = vunpack.c.l.b16 %v1011
  %v1317 = vunpack.c.h.b16 %v1011
  %v1318 = vunpack.c.l.b16 %v1012
  %v1319 = vunpack.c.h.b16 %v1012
  %v1320 = vunpack.c.l.b16 %v1013
  %v1321 = vunpack.c.h.b16 %v1013
  %v1322 = vunpack.c.l.b16 %v1014
  %v1323 = vunpack.c.h.b16 %v1014
  %v1324 = vunpack.c.l.b16 %v1015
  %v1325 = vunpack.c.h.b16 %v1015
  %v1326 = vunpack.c.l.b16 %v1016
  %v1327 = vunpack.c.h.b16 %v1016
  %v1328 = vunpack.c.l.b16 %v1017
  %v1329 = vunpack.c.h.b16 %v1017
  %v1330 = vunpack.c.l.b16 %v1018
  %v1331 = vunpack.c.h.b16 %v1018
  %v1332 = vunpack.c.l.b16 %v1019
  %v1333 = vunpack.c.h.b16 %v1019
  %v1334 = vunpack.c.l.b16 %v1020
  %v1335 = vunpack.c.h.b16 %v1020
  %v1336 = vunpack.c.l.b16 %v1021
  %v1337 = vunpack.c.h.b16 %v1021
  %v1338 = vunpack.c.l.b16 %v1022
  %v1339 = vunpack.c.h.b16 %v1022
  %v1340 = vunpack.c.l.b16 %v1023
  %v1341 = vunpack.c.h.b16 %v1023
  %v1342 = vunpack.c.l.b16 %v1024
  %v1343 = vunpack.c.h.b16 %v1024
  %v1344 = vunpack.c.l.b16 %v1025
  %v1345 = vunpack.c.h.b16 %v1025
  %v1346 = vunpack.c.l.b16 %v1026
  %v1347 = vunpack.c.h.b16 %v1026
  %v1348 = vunpack.c.l.b16 %v1027
  %v1349 = vunpack.c.h.b16 %v1027
  %v1350 = vunpack.c.l.b16 %v1028
  %v1351 = vunpack.c.h.b16 %v1028
  %v1352 = vunpack.c.l.b16 %v1029
  %v1353 = vunpack.c.h.b16 %v1029
  %v1354 = vunpack.c.l.b16 %v1030
  %v1355 = vunpack.c.h.b16 %v1030
  %v1356 = vunpack.c.l.b16 %v1031
  %v1357 = vunpack.c.h.b16 %v1031
  %v1358 = vunpack.c.l.b16 %v1032
  %v1359 = vunpack.c.h.b16 %v1032
  %v1360 = vunpack.c.l.b16 %v1033
  %v1361 = vunpack.c.h.b16 %v1033
  %v1362 = vunpack.c.l.b16 %v1034
  %v1363 = vunpack.c.h.b16 %v1034
  %v1364 = vunpack.c.l.b16 %v1035
  %v1365 = vunpack.c.h.b16 %v1035
  %v1366 = vunpack.c.l.b16 %v1036
  %v1367 = vunpack.c.h.b16 %v1036
  %v1368 = vunpack.c.l.b16 %v1037
  %v1369 = vunpack.c.h.b16 %v1037
  %v1370 = vunpack.c.l.b16 %v1038
  %v1371 = vunpack.c.h.b16 %v1038
  %v1372 = vunpack.c.l.b16 %v1039
  %v1373 = vunpack.c.h.b16 %v1039
  %v1374 = vunpack.c.l.b16 %v1040
  %v1375 = vunpack.c.h.b16 %v1040
  %v1376 = vunpack.c.l.b16 %v1041
  %v1377 = vunpack.c.h.b16 %v1041
  %v1378 = vunpack.c.l.b16 %v1042
  %v1379 = vunpack.c.h.b16 %v1042
  %v1380 = vunpack.c.l.b16 %v1043
  %v1381 = vunpack.c.h.b16 %v1043
  %v1382 = vunpack.c.l.b16 %v1044
  %v1383 = vunpack.c.h.b16 %v1044
  %v1384 = vunpack.c.l.b16 %v1045
  %v1385 = vunpack.c.h.b16 %v1045
  %v1386 = vunpack.c.l.b16 %v1046
  %v1387 = vunpack.c.h.b16 %v1046
  %v1388 = vunpack.c.l.b16 %v1047
  %v1389 = vunpack.c.h.b16 %v1047
  %v1390 = vunpack.c.l.b16 %v1048
  %v1391 = vunpack.c.h.b16 %v1048
  %v1392 = vunpack.c.l.b16 %v1049
  %v1393 = vunpack.c.h.b16 %v1049
  %v1394 = vunpack.c.l.b16 %v1050
  %v1395 = vunpack.c.h.b16 %v1050
  %v1396 = vunpack.c.l.b16 %v1051
  %v1397 = vunpack.c.h.b16 %v1051
  %v1398 = vunpack.c.l.b16 %v1052
  %v1399 = vunpack.c.h.b16 %v1052
  %v1400 = vunpack.c.l.b16 %v1053
  %v1401 = vunpack.c.h.b16 %v1053
  %v1402 = vunpack.c.l.b16 %v1054
  %v1403 = vunpack.c.h.b16 %v1054
  %v1404 = vunpack.c.l.b16 %v1055
  %v1405 = vunpack.c.h.b16 %v1055
  %v1406 = vunpack.c.l.b16 %v1056
  %v1407 = vunpack.c.h.b16 %v1056
  %v1408 = vunpack.c.l.b16 %v1057
  %v1409 = vunpack.c.h.b16 %v1057
  %v1410 = vunpack.c.l.b16 %v1058
  %v1411 = vunpack.c.h.b16 %v1058
  %v1412 = vunpack.c.l.b16 %v1059
  %v1413 = vunpack.c.h.b16 %v1059
  %v1414 = vunpack.c.l.b16 %v1060
  %v1415 = vunpack.c.h.b16 %v1060
  %v1416 = vunpack.c.l.b16 %v1061
  %v1417 = vunpack.c.h.b16 %v1061
  %v1418 = vunpack.c.l.b16 %v1062
  %v1419 = vunpack.c.h.b16 %v1062
  %v1420 = vunpack.c.l.b16 %v1063
  %v1421 = vunpack.c.h.b16 %v1063
  %v1422 = vunpack.c.l.b16 %v1064
  %v1423 = vunpack.c.h.b16 %v1064
  %v1424 = vunpack.c.l.b16 %v1065
  %v1425 = vunpack.c.h.b16 %v1065
  %v1426 = vunpack.c.l.b16 %v1066
  %v1427 = vunpack.c.h.b16 %v1066
  %v1428 = vunpack.c.l.b16 %v1067
  %v1429 = vunpack.c.h.b16 %v1067
  %v1430 = vunpack.c.l.b16 %v1068
  %v1431 = vunpack.c.h.b16 %v1068
  %v1432 = vunpack.c.l.b16 %v1069
  %v1433 = vunpack.c.h.b16 %v1069
  %v1434 = vunpack.c.l.b16 %v1070
  %v1435 = vunpack.c.h.b16 %v1070
  %v1436 = vunpack.c.l.b16 %v1071
  %v1437 = vunpack.c.h.b16 %v1071
  %v1438 = vunpack.c.l.b16 %v1072
  %v1439 = vunpack.c.h.b16 %v1072
  %v1440 = vunpack.c.l.b16 %v1073
  %v1441 = vunpack.c.h.b16 %v1073
  %v1442 = vunpack.c.l.b16 %v1074
  %v1443 = vunpack.c.h.b16 %v1074
  %v1444 = vunpack.c.l.b16 %v1075
  %v1445 = vunpack.c.h.b16 %v1075
  %v1446 = vunpack.c.l.b16 %v1076
  %v1447 = vunpack.c.h.b16 %v1076
  %v1448 = vunpack.c.l.b16 %v1077
  %v1449 = vunpack.c.h.b16 %v1077
  %v1450 = vunpack.c.l.b16 %v1078
  %v1451 = vunpack.c.h.b16 %v1078
  %v1452 = vunpack.c.l.b16 %v1079
  %v1453 = vunpack.c.h.b16 %v1079
  %v1454 = vunpack.c.l.b16 %v1080
  %v1455 = vunpack.c.h.b16 %v1080
  %v1456 = vunpack.c.l.b16 %v1081
  %v1457 = vunpack.c.h.b16 %v1081
  %v1458 = vunpack.c.l.b16 %v1082
  %v1459 = vunpack.c.h.b16 %v1082
  %v1460 = vunpack.c.l.b16 %v1083
  %v1461 = vunpack.c.h.b16 %v1083
  %v1462 = vunpack.c.l.b16 %v1084
  %v1463 = vunpack.c.h.b16 %v1084
  %v1464 = vunpack.c.l.b16 %v1085
  %v1465 = vunpack.c.h.b16 %v1085
  %v1466 = vunpack.c.l.b16 %v1086
  %v1467 = vunpack.c.h.b16 %v1086
  %v1468 = vunpack.c.l.b16 %v1087
  %v1469 = vunpack.c.h.b16 %v1087
  %v1470 = vpack.c.b16 %v1312, %v1310
  %v1471 = vpack.c.b16 %v1313, %v1311
  %v1472 = vpack.c.b16 %v1316, %v1314
  %v1473 = vpack.c.b16 %v1317, %v1315
  %v1474 = vpack.c.b16 %v1320, %v1318
  %v1475 = vpack.c.b16 %v1321, %v1319
  %v1476 = vpack.c.b16 %v1324, %v1322
  %v1477 = vpack.c.b16 %v1325, %v1323
  %v1478 = vpack.c.b16 %v1328, %v1326
  %v1479 = vpack.c.b16 %v1329, %v1327
  %v1480 = vpack.c.b16 %v1332, %v1330
  %v1481 = vpack.c.b16 %v1333, %v1331
  %v1482 = vpack.c.b16 %v1336, %v1334
  %v1483 = vpack.c.b16 %v1337, %v1335
  %v1484 = vpack.c.b16 %v1340, %v1338
  %v1485 = vpack.c.b16 %v1341, %v1339
  %v1486 = vpack.c.b16 %v1344, %v1342
  %v1487 = vpack.c.b16 %v1345, %v1343
  %v1488 = vpack.c.b16 %v1348, %v1346
  %v1489 = vpack.c.b16 %v1349, %v1347
  %v1490 = vpack.c.b16 %v1352, %v1350
  %v1491 = vpack.c.b16 %v1353, %v1351
  %v1492 = vpack.c.b16 %v1356, %v1354
  %v1493 = vpack.c.b16 %v1357, %v1355
  %v1494 = vpack.c.b16 %v1360, %v1358
  %v1495 = vpack.c.b16 %v1361, %v1359
  %v1496 = vpack.c.b16 %v1364, %v1362
  %v1497 = vpack.c.b16 %v1365, %v1363
  %v1498 = vpack.c.b16 %v1368, %v1366
  %v1499 = vpack.c.b16 %v1369, %v1367
  %v1500 = vpack.c.b16 %v1372, %v1370
  %v1501 = vpack.c.b16 %v1373, %v1371
  %v1502 = vpack.c.b16 %v1376, %v1374
  %v1503 = vpack.c.b16 %v1377, %v1375
  %v1504 = vpack.c.b16 %v1380, %v1378
  %v1505 = vpack.c.b16 %v1381, %v1379
  %v1506 = vpack.c.b16 %v1384, %v1382
  %v1507 = vpack.c.b16 %v1385, %v1383
  %v1508 = vpack.c.b16 %v1388, %v1386
  %v1509 = vpack.c.b16 %v1389, %v1387
  %v1510 = vpack.c.b16 %v1392, %v1390
  %v1511 = vpack.c.b16 %v1393, %v1391
  %v1512 = vpack.c.b16 %v1396, %v1394
  %v1513 = vpack.c.b16 %v1397, %v1395
  %v1514 = vpack.c.b16 %v1400, %v1398
  %v1515 = vpack.c.b16 %v1401, %v1399
  %v1516 = vpack.c.b16 %v1404, %v1402
  %v1517 = vpack.c.b16 %v1405, %v1403
  %v1518 = vpack.c.b16 %v1408, %v1406
  %v1519 = vpack.c.b16 %v1409, %v1407
  %v1520 = vpack.c.b16 %v1412, %v1410
  %v1521 = vpack.c.b16 %v1413, %v1411
  %v1522 = vpack.c.b16 %v1416, %v1414
  %v1523 = vpack.c.b16 %v1417, %v1415
  %v1524 = vpack.c.b16 %v1420, %v1418
  %v1525 = vpack.c.b16 %v1421, %v1419
  %v1526 = vpack.c.b16 %v1424, %v1422
  %v1527 = vpack.c.b16 %v1425, %v1423
  %v1528 = vpack.c.b16 %v1428, %v1426
  %v1529 = vpack.c.b16 %v1429, %v1427
  %v1530 = vpack.c.b16 %v1432, %v1430
  %v1531 = vpack.c.b16 %v1433, %v1431
  %v1532 = vpack.c.b16 %v1436, %v1434
  %v1533 = vpack.c.b16 %v1437, %v1435
  %v1534 = vpack.c.b16 %v1440, %v1438
  %v1535 = vpack.c.b16 %v1441, %v1439
  %v1536 = vpack.c.b16 %v1444, %v1442
  %v1537 = vpack.c.b16 %v1445, %v1443
  %v1538 = vpack.c.b16 %v1448, %v1446
  %v1539 = vpack.c.b16 %v1449, %v1447
  %v1540 = vpack.c.b16 %v1452, %v1450
  %v1541 = vpack.c.b16 %v1453, %v1451
  %v1542 = vpack.c.b16 %v1456, %v1454
  %v1543 = vpack.c.b16 %v1457, %v1455
  %v1544 = vpack.c.b16 %v1460, %v1458
  %v1545 = vpack.c.b16 %v1461, %v1459
  %v1546 = vpack.c.b16 %v1464, %v1462
  %v1547 = vpack.c.b16 %v1465, %v1463
  %v1548 = vpack.c.b16 %v1468, %v1466
  %v1549 = vpack.c.b16 %v1469, %v1467
  %1630 = vmatprep.subr.bf16.mxu0 %v1485
  %1631 = vmatpush1.bf16.msra.mxu0 %v1484
  %1632 = vmatprep.subr.bf16.mxu0 %v1483
  %1633 = vmatpush1.bf16.msra.mxu0 %v1482
  %1634 = vmatprep.subr.bf16.mxu0 %v1481
  %1635 = vmatpush1.bf16.msra.mxu0 %v1480
  %1636 = vmatprep.subr.bf16.mxu0 %v1479
  %1637 = vmatpush1.bf16.msra.mxu0 %v1478
  %1638 = vmatprep.subr.bf16.mxu0 %v1477
  %1639 = vmatpush1.bf16.msra.mxu0 %v1476
  %1640 = vmatprep.subr.bf16.mxu0 %v1475
  %1641 = vmatpush1.bf16.msra.mxu0 %v1474
  %1642 = vmatprep.subr.bf16.mxu0 %v1473
  %1643 = vmatpush1.bf16.msra.mxu0 %v1472
  %1644 = vmatprep.subr.bf16.mxu0 %v1471
  %1645 = vmatpush1.bf16.msra.mxu0 %v1470
  %1646 = vmatprep.subr.bf16.mxu0 %v1501
  %1647 = vmatpush2.bf16.msra.mxu0 %v1500
  %1648 = vmatprep.subr.bf16.mxu0 %v1499
  %1649 = vmatpush2.bf16.msra.mxu0 %v1498
  %1650 = vmatprep.subr.bf16.mxu0 %v1497
  %1651 = vmatpush2.bf16.msra.mxu0 %v1496
  %1652 = vmatprep.subr.bf16.mxu0 %v1495
  %1653 = vmatpush2.bf16.msra.mxu0 %v1494
  %1654 = vmatprep.subr.bf16.mxu0 %v1493
  %1655 = vmatpush2.bf16.msra.mxu0 %v1492
  %1656 = vmatprep.subr.bf16.mxu0 %v1491
  %1657 = vmatpush2.bf16.msra.mxu0 %v1490
  %1658 = vmatprep.subr.bf16.mxu0 %v1489
  %1659 = vmatpush2.bf16.msra.mxu0 %v1488
  %1660 = vmatprep.subr.bf16.mxu0 %v1487
  %1661 = vmatpush2.bf16.msra.mxu0 %v1486
  %1662 = vmatprep.mubr.bf16.mxu0 %v1181
  %1663 = vmatmul.mubr.bf16.gmra.mxu0 %v1180
  %v1664 = vpop.f32.mrf.mxu0
  %v1665 = vadd.f32 %v1093, %v1664
  %v1666 = vpop.f32.mrf.mxu0
  %v1667 = vadd.f32 %v1097, %v1666
  %v1668 = vpop.f32.mrf.mxu0
  %v1669 = vadd.f32 %v1093, %v1668
  %v1670 = vpop.f32.mrf.mxu0
  %v1671 = vadd.f32 %v1097, %v1670
  %1672 = vmatprep.mubr.bf16.mxu0 %v1186
  %1673 = vmatmul.mubr.bf16.gmra.mxu0 %v1185
  %v1674 = vpop.f32.mrf.mxu0
  %v1675 = vadd.f32 %v1093, %v1674
  %v1676 = vpop.f32.mrf.mxu0
  %v1677 = vadd.f32 %v1097, %v1676
  %v1678 = vpop.f32.mrf.mxu0
  %v1679 = vadd.f32 %v1093, %v1678
  %v1680 = vpop.f32.mrf.mxu0
  %v1681 = vadd.f32 %v1097, %v1680
  %1682 = vmatprep.mubr.bf16.mxu0 %v1191
  %1683 = vmatmul.mubr.bf16.gmra.mxu0 %v1190
  %v1684 = vpop.f32.mrf.mxu0
  %v1685 = vadd.f32 %v1093, %v1684
  %v1686 = vpop.f32.mrf.mxu0
  %v1687 = vadd.f32 %v1097, %v1686
  %v1688 = vpop.f32.mrf.mxu0
  %v1689 = vadd.f32 %v1093, %v1688
  %v1690 = vpop.f32.mrf.mxu0
  %v1691 = vadd.f32 %v1097, %v1690
  %1692 = vmatprep.mubr.bf16.mxu0 %v1196
  %1693 = vmatmul.mubr.bf16.gmra.mxu0 %v1195
  %v1694 = vpop.f32.mrf.mxu0
  %v1695 = vadd.f32 %v1093, %v1694
  %v1696 = vpop.f32.mrf.mxu0
  %v1697 = vadd.f32 %v1097, %v1696
  %v1698 = vpop.f32.mrf.mxu0
  %v1699 = vadd.f32 %v1093, %v1698
  %v1700 = vpop.f32.mrf.mxu0
  %v1701 = vadd.f32 %v1097, %v1700
  %1702 = vmatprep.mubr.bf16.mxu0 %v1201
  %1703 = vmatmul.mubr.bf16.gmra.mxu0 %v1200
  %v1704 = vpop.f32.mrf.mxu0
  %v1705 = vadd.f32 %v1093, %v1704
  %v1706 = vpop.f32.mrf.mxu0
  %v1707 = vadd.f32 %v1097, %v1706
  %v1708 = vpop.f32.mrf.mxu0
  %v1709 = vadd.f32 %v1093, %v1708
  %v1710 = vpop.f32.mrf.mxu0
  %v1711 = vadd.f32 %v1097, %v1710
  %1712 = vdwg.mxu0
  %1713 = vmatprep.subr.bf16.mxu0 %v1517
  %1714 = vmatpush1.bf16.msra.mxu0 %v1516
  %1715 = vmatprep.subr.bf16.mxu0 %v1515
  %1716 = vmatpush1.bf16.msra.mxu0 %v1514
  %1717 = vmatprep.subr.bf16.mxu0 %v1513
  %1718 = vmatpush1.bf16.msra.mxu0 %v1512
  %1719 = vmatprep.subr.bf16.mxu0 %v1511
  %1720 = vmatpush1.bf16.msra.mxu0 %v1510
  %1721 = vmatprep.subr.bf16.mxu0 %v1509
  %1722 = vmatpush1.bf16.msra.mxu0 %v1508
  %1723 = vmatprep.subr.bf16.mxu0 %v1507
  %1724 = vmatpush1.bf16.msra.mxu0 %v1506
  %1725 = vmatprep.subr.bf16.mxu0 %v1505
  %1726 = vmatpush1.bf16.msra.mxu0 %v1504
  %1727 = vmatprep.subr.bf16.mxu0 %v1503
  %1728 = vmatpush1.bf16.msra.mxu0 %v1502
  %1729 = vmatprep.subr.bf16.mxu0 %v1533
  %1730 = vmatpush2.bf16.msra.mxu0 %v1532
  %1731 = vmatprep.subr.bf16.mxu0 %v1531
  %1732 = vmatpush2.bf16.msra.mxu0 %v1530
  %1733 = vmatprep.subr.bf16.mxu0 %v1529
  %1734 = vmatpush2.bf16.msra.mxu0 %v1528
  %1735 = vmatprep.subr.bf16.mxu0 %v1527
  %1736 = vmatpush2.bf16.msra.mxu0 %v1526
  %1737 = vmatprep.subr.bf16.mxu0 %v1525
  %1738 = vmatpush2.bf16.msra.mxu0 %v1524
  %1739 = vmatprep.subr.bf16.mxu0 %v1523
  %1740 = vmatpush2.bf16.msra.mxu0 %v1522
  %1741 = vmatprep.subr.bf16.mxu0 %v1521
  %1742 = vmatpush2.bf16.msra.mxu0 %v1520
  %1743 = vmatprep.subr.bf16.mxu0 %v1519
  %1744 = vmatpush2.bf16.msra.mxu0 %v1518
  %1745 = vmatprep.mubr.bf16.mxu0 %v1183
  %1746 = vmatmul.mubr.bf16.gmra.mxu0 %v1182
  %v1747 = vpop.f32.mrf.mxu0
  %v1748 = vadd.f32 %v1665, %v1747
  %v1749 = vpop.f32.mrf.mxu0
  %v1750 = vadd.f32 %v1667, %v1749
  %v1751 = vpop.f32.mrf.mxu0
  %v1752 = vadd.f32 %v1669, %v1751
  %v1753 = vpop.f32.mrf.mxu0
  %v1754 = vadd.f32 %v1671, %v1753
  %1755 = vmatprep.mubr.bf16.mxu0 %v1188
  %1756 = vmatmul.mubr.bf16.gmra.mxu0 %v1187
  %v1757 = vpop.f32.mrf.mxu0
  %v1758 = vadd.f32 %v1675, %v1757
  %v1759 = vpop.f32.mrf.mxu0
  %v1760 = vadd.f32 %v1677, %v1759
  %v1761 = vpop.f32.mrf.mxu0
  %v1762 = vadd.f32 %v1679, %v1761
  %v1763 = vpop.f32.mrf.mxu0
  %v1764 = vadd.f32 %v1681, %v1763
  %1765 = vmatprep.mubr.bf16.mxu0 %v1193
  %1766 = vmatmul.mubr.bf16.gmra.mxu0 %v1192
  %v1767 = vpop.f32.mrf.mxu0
  %v1768 = vadd.f32 %v1685, %v1767
  %v1769 = vpop.f32.mrf.mxu0
  %v1770 = vadd.f32 %v1687, %v1769
  %v1771 = vpop.f32.mrf.mxu0
  %v1772 = vadd.f32 %v1689, %v1771
  %v1773 = vpop.f32.mrf.mxu0
  %v1774 = vadd.f32 %v1691, %v1773
  %1775 = vmatprep.mubr.bf16.mxu0 %v1198
  %1776 = vmatmul.mubr.bf16.gmra.mxu0 %v1197
  %v1777 = vpop.f32.mrf.mxu0
  %v1778 = vadd.f32 %v1695, %v1777
  %v1779 = vpop.f32.mrf.mxu0
  %v1780 = vadd.f32 %v1697, %v1779
  %v1781 = vpop.f32.mrf.mxu0
  %v1782 = vadd.f32 %v1699, %v1781
  %v1783 = vpop.f32.mrf.mxu0
  %v1784 = vadd.f32 %v1701, %v1783
  %1785 = vmatprep.mubr.bf16.mxu0 %v1203
  %1786 = vmatmul.mubr.bf16.gmra.mxu0 %v1202
  %v1787 = vpop.f32.mrf.mxu0
  %v1788 = vadd.f32 %v1705, %v1787
  %v1789 = vpop.f32.mrf.mxu0
  %v1790 = vadd.f32 %v1707, %v1789
  %v1791 = vpop.f32.mrf.mxu0
  %v1792 = vadd.f32 %v1709, %v1791
  %v1793 = vpop.f32.mrf.mxu0
  %v1794 = vadd.f32 %v1711, %v1793
  %1795 = vdwg.mxu0
  %1796 = vmatprep.subr.bf16.mxu0 %v1549
  %1797 = vmatpush1.bf16.msra.mxu0 %v1548
  %1798 = vmatprep.subr.bf16.mxu0 %v1547
  %1799 = vmatpush1.bf16.msra.mxu0 %v1546
  %1800 = vmatprep.subr.bf16.mxu0 %v1545
  %1801 = vmatpush1.bf16.msra.mxu0 %v1544
  %1802 = vmatprep.subr.bf16.mxu0 %v1543
  %1803 = vmatpush1.bf16.msra.mxu0 %v1542
  %1804 = vmatprep.subr.bf16.mxu0 %v1541
  %1805 = vmatpush1.bf16.msra.mxu0 %v1540
  %1806 = vmatprep.subr.bf16.mxu0 %v1539
  %1807 = vmatpush1.bf16.msra.mxu0 %v1538
  %1808 = vmatprep.subr.bf16.mxu0 %v1537
  %1809 = vmatpush1.bf16.msra.mxu0 %v1536
  %1810 = vmatprep.subr.bf16.mxu0 %v1535
  %1811 = vmatpush1.bf16.msra.mxu0 %v1534
  %1812 = vmatprep.subr.bf16.mxu0 0
  %1813 = vmatpush2.bf16.msra.mxu0 0
  %1814 = vmatprep.subr.bf16.mxu0 0
  %1815 = vmatpush2.bf16.msra.mxu0 0
  %1816 = vmatprep.subr.bf16.mxu0 0
  %1817 = vmatpush2.bf16.msra.mxu0 0
  %1818 = vmatprep.subr.bf16.mxu0 0
  %1819 = vmatpush2.bf16.msra.mxu0 0
  %1820 = vmatprep.subr.bf16.mxu0 0
  %1821 = vmatpush2.bf16.msra.mxu0 0
  %1822 = vmatprep.subr.bf16.mxu0 0
  %1823 = vmatpush2.bf16.msra.mxu0 0
  %1824 = vmatprep.subr.bf16.mxu0 0
  %1825 = vmatpush2.bf16.msra.mxu0 0
  %1826 = vmatprep.subr.bf16.mxu0 0
  %1827 = vmatpush2.bf16.msra.mxu0 0
  %1828 = vmatprep.mubr.bf16.mxu0 0
  %1829 = vmatmul.mubr.bf16.gmra.mxu0 %v1184
  %v1830 = vpop.f32.mrf.mxu0
  %v1831 = vadd.f32 %v1748, %v1830
  %v1832 = vpop.f32.mrf.mxu0
  %v1833 = vadd.f32 %v1750, %v1832
  %v1834 = vpop.f32.mrf.mxu0
  %v1835 = vadd.f32 %v1752, %v1834
  %v1836 = vpop.f32.mrf.mxu0
  %v1837 = vadd.f32 %v1754, %v1836
  %1838 = vmatprep.mubr.bf16.mxu0 0
  %1839 = vmatmul.mubr.bf16.gmra.mxu0 %v1189
  %v1840 = vpop.f32.mrf.mxu0
  %v1841 = vadd.f32 %v1758, %v1840
  %v1842 = vpop.f32.mrf.mxu0
  %v1843 = vadd.f32 %v1760, %v1842
  %v1844 = vpop.f32.mrf.mxu0
  %v1845 = vadd.f32 %v1762, %v1844
  %v1846 = vpop.f32.mrf.mxu0
  %v1847 = vadd.f32 %v1764, %v1846
  %1848 = vmatprep.mubr.bf16.mxu0 0
  %1849 = vmatmul.mubr.bf16.gmra.mxu0 %v1194
  %v1850 = vpop.f32.mrf.mxu0
  %v1851 = vadd.f32 %v1768, %v1850
  %v1852 = vpop.f32.mrf.mxu0
  %v1853 = vadd.f32 %v1770, %v1852
  %v1854 = vpop.f32.mrf.mxu0
  %v1855 = vadd.f32 %v1772, %v1854
  %v1856 = vpop.f32.mrf.mxu0
  %v1857 = vadd.f32 %v1774, %v1856
  %1858 = vmatprep.mubr.bf16.mxu0 0
  %1859 = vmatmul.mubr.bf16.gmra.mxu0 %v1199
  %v1860 = vpop.f32.mrf.mxu0
  %v1861 = vadd.f32 %v1778, %v1860
  %v1862 = vpop.f32.mrf.mxu0
  %v1863 = vadd.f32 %v1780, %v1862
  %v1864 = vpop.f32.mrf.mxu0
  %v1865 = vadd.f32 %v1782, %v1864
  %v1866 = vpop.f32.mrf.mxu0
  %v1867 = vadd.f32 %v1784, %v1866
  %1868 = vmatprep.mubr.bf16.mxu0 0
  %1869 = vmatmul.mubr.bf16.gmra.mxu0 %v1204
  %v1870 = vpop.f32.mrf.mxu0
  %v1871 = vadd.f32 %v1788, %v1870
  %v1872 = vpop.f32.mrf.mxu0
  %v1873 = vadd.f32 %v1790, %v1872
  %v1874 = vpop.f32.mrf.mxu0
  %v1875 = vadd.f32 %v1792, %v1874
  %v1876 = vpop.f32.mrf.mxu0
  %v1877 = vadd.f32 %v1794, %v1876
  %1878 = vdwg.mxu0
  %v1879 = vtanh.pop %v1831
  %v1880 = vtanh.pop %v1833
  %v1881 = vtanh.pop %v1835
  %v1882 = vtanh.pop %v1837
  %v1883 = vtanh.pop %v1841
  %v1884 = vtanh.pop %v1843
  %v1885 = vtanh.pop %v1845
  %v1886 = vtanh.pop %v1847
  %v1887 = vtanh.pop %v1851
  %v1888 = vtanh.pop %v1853
  %v1889 = vtanh.pop %v1855
  %v1890 = vtanh.pop %v1857
  %v1891 = vtanh.pop %v1861
  %v1892 = vtanh.pop %v1863
  %v1893 = vtanh.pop %v1865
  %v1894 = vtanh.pop %v1867
  %v1895 = vtanh.pop %v1871
  %v1896 = vtanh.pop %v1873
  %v1897 = vtanh.pop %v1875
  %v1898 = vtanh.pop %v1877
  %v1899 = vadd.f32 %v1879, %v1881
  %v1900 = vadd.f32 %v1880, %v1882
  %v1901 = vadd.f32 %v1883, %v1885
  %v1902 = vadd.f32 %v1884, %v1886
  %v1903 = vadd.f32 %v1887, %v1889
  %v1904 = vadd.f32 %v1888, %v1890
  %v1905 = vadd.f32 %v1891, %v1893
  %v1906 = vadd.f32 %v1892, %v1894
  %v1907 = vadd.f32 %v1895, %v1897
  %v1908 = vadd.f32 %v1896, %v1898
  %v1909 = vmul.f32 %v1899, 0.5
  %v1910 = vmul.f32 %v1900, 0.5
  %v1911 = vmul.f32 %v1901, 0.5
  %v1912 = vmul.f32 %v1902, 0.5
  %v1913 = vmul.f32 %v1903, 0.5
  %v1914 = vmul.f32 %v1904, 0.5
  %v1915 = vmul.f32 %v1905, 0.5
  %v1916 = vmul.f32 %v1906, 0.5
  %v1917 = vmul.f32 %v1907, 0.5
  %v1918 = vmul.f32 %v1908, 0.5
  %v1919 = vpack.c.bf16 %v1911, %v1909
  %v1920 = vpack.c.bf16 %v1912, %v1910
  %v1921 = vpack.c.bf16 %v1915, %v1913
  %v1922 = vpack.c.bf16 %v1916, %v1914
  %v1923 = vpack.c.bf16 %v1917, %v1917
  %v1924 = vpack.c.bf16 %v1918, %v1918
  %v1925 = vld [vmem:[%s6] sm:$0xf]
  %v1926 = vld [vmem:[%s6 + $0x4] sm:$0xf]
  %v1927 = vld [vmem:[%s6 + $0x8] sm:$0xf]
  %v1928 = vld [vmem:[%s6 + $0xc] sm:$0xf]
  %v1929 = vld [vmem:[%s6 + $0x10] sm:$0xf]
  %v1930 = vld [vmem:[%s6 + $0x14] sm:$0xf]
  %v1931 = vld [vmem:[%s6 + $0x18] sm:$0xf]
  %v1932 = vld [vmem:[%s6 + $0x1c] sm:$0xf]
  %v1933 = vld [vmem:[%s6 + $0x20] sm:$0xf]
  %v1934 = vld [vmem:[%s6 + $0x24] sm:$0xf]
  %v1935 = vld [vmem:[%s6 + $0x28] sm:$0xf]
  %v1936 = vld [vmem:[%s6 + $0x2c] sm:$0xf]
  %v1937 = vld [vmem:[%s6 + $0x30] sm:$0xf]
  %v1938 = vld [vmem:[%s6 + $0x34] sm:$0xf]
  %v1939 = vld [vmem:[%s6 + $0x38] sm:$0xf]
  %v1940 = vld [vmem:[%s6 + $0x3c] sm:$0xf]
  %v1941 = vld [vmem:[%s6 + $0x40] sm:$0xf]
  %v1942 = vld [vmem:[%s6 + $0x44] sm:$0xf]
  %v1943 = vld [vmem:[%s6 + $0x48] sm:$0xf]
  %v1944 = vld [vmem:[%s6 + $0x4c] sm:$0xf]
  %v1965 = vunpack.c.l.b16 %v1925
  %v1966 = vunpack.c.l.b16 %v1926
  %v1967 = vunpack.c.l.b16 %v1927
  %v1968 = vunpack.c.l.b16 %v1928
  %v1969 = vunpack.c.l.b16 %v1929
  %v1970 = vunpack.c.l.b16 %v1930
  %v1971 = vunpack.c.l.b16 %v1931
  %v1972 = vunpack.c.l.b16 %v1932
  %v1973 = vunpack.c.l.b16 %v1933
  %v1974 = vunpack.c.l.b16 %v1934
  %v1975 = vunpack.c.l.b16 %v1935
  %v1976 = vunpack.c.l.b16 %v1936
  %v1977 = vunpack.c.l.b16 %v1937
  %v1978 = vunpack.c.l.b16 %v1938
  %v1979 = vunpack.c.l.b16 %v1939
  %v1980 = vunpack.c.l.b16 %v1940
  %v1981 = vunpack.c.l.b16 %v1941
  %v1982 = vunpack.c.l.b16 %v1942
  %v1983 = vunpack.c.l.b16 %v1943
  %v1984 = vunpack.c.l.b16 %v1944
  %v1985 = vpack.c.b16 %v1966, %v1965
  %v1986 = vpack.c.b16 %v1968, %v1967
  %v1987 = vpack.c.b16 %v1970, %v1969
  %v1988 = vpack.c.b16 %v1972, %v1971
  %v1989 = vpack.c.b16 %v1974, %v1973
  %v1990 = vpack.c.b16 %v1976, %v1975
  %v1991 = vpack.c.b16 %v1978, %v1977
  %v1992 = vpack.c.b16 %v1980, %v1979
  %v1993 = vpack.c.b16 %v1982, %v1981
  %v1994 = vpack.c.b16 %v1984, %v1983
  %v2006 = vsel %vm331, %v1920, 0
  %v2009 = vsel %vm331, %v1922, 0
  %v2012 = vsel %vm331, %v1924, 0
  %2014 = vmatprep.subr.bf16.mxu0 0
  %2015 = vmatpush1.bf16.msra.mxu0 %v1992
  %2016 = vmatprep.subr.bf16.mxu0 0
  %2017 = vmatpush1.bf16.msra.mxu0 %v1991
  %2018 = vmatprep.subr.bf16.mxu0 0
  %2019 = vmatpush1.bf16.msra.mxu0 %v1990
  %2020 = vmatprep.subr.bf16.mxu0 0
  %2021 = vmatpush1.bf16.msra.mxu0 %v1989
  %2022 = vmatprep.subr.bf16.mxu0 0
  %2023 = vmatpush1.bf16.msra.mxu0 %v1988
  %2024 = vmatprep.subr.bf16.mxu0 0
  %2025 = vmatpush1.bf16.msra.mxu0 %v1987
  %2026 = vmatprep.subr.bf16.mxu0 0
  %2027 = vmatpush1.bf16.msra.mxu0 %v1986
  %2028 = vmatprep.subr.bf16.mxu0 0
  %2029 = vmatpush1.bf16.msra.mxu0 %v1985
  %2030 = vmatprep.subr.bf16.mxu0 0
  %2031 = vmatpush2.bf16.msra.mxu0 0
  %2032 = vmatprep.subr.bf16.mxu0 0
  %2033 = vmatpush2.bf16.msra.mxu0 0
  %2034 = vmatprep.subr.bf16.mxu0 0
  %2035 = vmatpush2.bf16.msra.mxu0 0
  %2036 = vmatprep.subr.bf16.mxu0 0
  %2037 = vmatpush2.bf16.msra.mxu0 0
  %2038 = vmatprep.subr.bf16.mxu0 0
  %2039 = vmatpush2.bf16.msra.mxu0 0
  %2040 = vmatprep.subr.bf16.mxu0 0
  %2041 = vmatpush2.bf16.msra.mxu0 0
  %2042 = vmatprep.subr.bf16.mxu0 0
  %2043 = vmatpush2.bf16.msra.mxu0 %v1994
  %2044 = vmatprep.subr.bf16.mxu0 0
  %2045 = vmatpush2.bf16.msra.mxu0 %v1993
  %2046 = vmatprep.mubr.bf16.mxu0 %v2006
  %2047 = vmatmul.mubr.bf16.gmra.mxu0 %v1919
  %v2048 = vpop.f32.mrf.mxu0
  %v2049 = vadd.f32 0.0, %v2048
  %v2050 = vpop.f32.mrf.mxu0
  %v2051 = vpop.f32.mrf.mxu0
  %v2052 = vadd.f32 0.0, %v2051
  %v2053 = vpop.f32.mrf.mxu0
  %2054 = vmatprep.mubr.bf16.mxu0 %v2009
  %2055 = vmatmul.mubr.bf16.gmra.mxu0 %v1921
  %v2056 = vpop.f32.mrf.mxu0
  %v2057 = vadd.f32 0.0, %v2056
  %v2058 = vpop.f32.mrf.mxu0
  %v2059 = vpop.f32.mrf.mxu0
  %v2060 = vadd.f32 0.0, %v2059
  %v2061 = vpop.f32.mrf.mxu0
  %2062 = vmatprep.mubr.bf16.mxu0 %v2012
  %2063 = vmatmul.mubr.bf16.gmra.mxu0 %v1923
  %v2064 = vpop.f32.mrf.mxu0
  %v2065 = vadd.f32 0.0, %v2064
  %v2066 = vpop.f32.mrf.mxu0
  %v2067 = vpop.f32.mrf.mxu0
  %v2068 = vpop.f32.mrf.mxu0
  %2069 = vdwg.mxu0
  %v2070 = vpack.c.bf16 %v2052, %v2049
  %v2071 = vpack.c.bf16 %v2060, %v2057
  %v2072 = vpack.c.bf16 %v2065, %v2065
  %2073 = vst [vmem:[#allocation3] sm:$0xf] %v2070
  %v2075 = vunpack.c.h.b16 %v2070
  %v2076 = vpack.c.b16 %v2075, %v2075
  %2078 = vst [vmem:[#allocation3 + $0x4] sm:$0xf] %v2076
  %2079 = vst [vmem:[#allocation3 + $0x8] sm:$0xf] %v2071
  %v2081 = vunpack.c.h.b16 %v2071
  %v2082 = vpack.c.b16 %v2081, %v2081
  %2084 = vst [vmem:[#allocation3 + $0xc] sm:$0xf] %v2082
  %2085 = vst [vmem:[#allocation3 + $0x10] sm:$0xf] %v2072
  %v2086 = vld [vmem:[#allocation3] sm:$0xff]
  %v2087 = vld [vmem:[#allocation3 + $0x8] sm:$0xff]
  %v2088 = vld [vmem:[#allocation3 + $0x10] sm:$0xf]
  %v2089 = vld [vmem:[%s7] sm:$0xf]
  %v2090 = vld [vmem:[%s7 + $0x4] sm:$0xf]
  %v2091 = vld [vmem:[%s7 + $0x8] sm:$0xf]
  %v2092 = vld [vmem:[%s7 + $0xc] sm:$0xf]
  %v2093 = vld [vmem:[%s7 + $0x10] sm:$0xf]
  %v2094 = vld [vmem:[%s7 + $0x14] sm:$0xf]
  %v2095 = vld [vmem:[%s7 + $0x18] sm:$0xf]
  %v2096 = vld [vmem:[%s7 + $0x1c] sm:$0xf]
  %v2097 = vld [vmem:[%s7 + $0x20] sm:$0xf]
  %v2098 = vld [vmem:[%s7 + $0x24] sm:$0xf]
  %v2099 = vld [vmem:[%s7 + $0x28] sm:$0xf]
  %v2100 = vld [vmem:[%s7 + $0x2c] sm:$0xf]
  %v2101 = vld [vmem:[%s7 + $0x30] sm:$0xf]
  %v2102 = vld [vmem:[%s7 + $0x34] sm:$0xf]
  %v2103 = vld [vmem:[%s7 + $0x38] sm:$0xf]
  %v2104 = vld [vmem:[%s7 + $0x3c] sm:$0xf]
  %v2105 = vld [vmem:[%s7 + $0x40] sm:$0xf]
  %v2106 = vld [vmem:[%s7 + $0x44] sm:$0xf]
  %v2107 = vld [vmem:[%s7 + $0x48] sm:$0xf]
  %v2108 = vld [vmem:[%s7 + $0x4c] sm:$0xf]
  %v2109 = vld [vmem:[%s7 + $0x50] sm:$0xf]
  %v2110 = vld [vmem:[%s7 + $0x54] sm:$0xf]
  %v2111 = vld [vmem:[%s7 + $0x58] sm:$0xf]
  %v2112 = vld [vmem:[%s7 + $0x5c] sm:$0xf]
  %v2113 = vld [vmem:[%s7 + $0x60] sm:$0xf]
  %v2114 = vld [vmem:[%s7 + $0x64] sm:$0xf]
  %v2115 = vld [vmem:[%s7 + $0x68] sm:$0xf]
  %v2116 = vld [vmem:[%s7 + $0x6c] sm:$0xf]
  %v2117 = vld [vmem:[%s7 + $0x70] sm:$0xf]
  %v2118 = vld [vmem:[%s7 + $0x74] sm:$0xf]
  %v2119 = vld [vmem:[%s7 + $0x78] sm:$0xf]
  %v2120 = vld [vmem:[%s7 + $0x7c] sm:$0xf]
  %v2121 = vld [vmem:[%s7 + $0x80] sm:$0xf]
  %v2122 = vld [vmem:[%s7 + $0x84] sm:$0xf]
  %v2123 = vld [vmem:[%s7 + $0x88] sm:$0xf]
  %v2124 = vld [vmem:[%s7 + $0x8c] sm:$0xf]
  %v2125 = vld [vmem:[%s7 + $0x90] sm:$0xf]
  %v2126 = vld [vmem:[%s7 + $0x94] sm:$0xf]
  %v2127 = vld [vmem:[%s7 + $0x98] sm:$0xf]
  %v2128 = vld [vmem:[%s7 + $0x9c] sm:$0xf]
  %v2129 = vld [vmem:[%s7 + $0xa0] sm:$0xf]
  %v2130 = vld [vmem:[%s7 + $0xa4] sm:$0xf]
  %v2131 = vld [vmem:[%s7 + $0xa8] sm:$0xf]
  %v2132 = vld [vmem:[%s7 + $0xac] sm:$0xf]
  %v2133 = vld [vmem:[%s7 + $0xb0] sm:$0xf]
  %v2134 = vld [vmem:[%s7 + $0xb4] sm:$0xf]
  %v2135 = vld [vmem:[%s7 + $0xb8] sm:$0xf]
  %v2136 = vld [vmem:[%s7 + $0xbc] sm:$0xf]
  %v2137 = vld [vmem:[%s7 + $0xc0] sm:$0xf]
  %v2138 = vld [vmem:[%s7 + $0xc4] sm:$0xf]
  %v2139 = vld [vmem:[%s7 + $0xc8] sm:$0xf]
  %v2140 = vld [vmem:[%s7 + $0xcc] sm:$0xf]
  %v2141 = vld [vmem:[%s7 + $0xd0] sm:$0xf]
  %v2142 = vld [vmem:[%s7 + $0xd4] sm:$0xf]
  %v2143 = vld [vmem:[%s7 + $0xd8] sm:$0xf]
  %v2144 = vld [vmem:[%s7 + $0xdc] sm:$0xf]
  %v2145 = vld [vmem:[%s7 + $0xe0] sm:$0xf]
  %v2146 = vld [vmem:[%s7 + $0xe4] sm:$0xf]
  %v2147 = vld [vmem:[%s7 + $0xe8] sm:$0xf]
  %v2148 = vld [vmem:[%s7 + $0xec] sm:$0xf]
  %v2149 = vld [vmem:[%s7 + $0xf0] sm:$0xf]
  %v2150 = vld [vmem:[%s7 + $0xf4] sm:$0xf]
  %v2151 = vld [vmem:[%s7 + $0xf8] sm:$0xf]
  %v2152 = vld [vmem:[%s7 + $0xfc] sm:$0xf]
  %v2153 = vld [vmem:[%s7 + $0x100] sm:$0xf]
  %v2154 = vld [vmem:[%s7 + $0x104] sm:$0xf]
  %v2155 = vld [vmem:[%s7 + $0x108] sm:$0xf]
  %v2156 = vld [vmem:[%s7 + $0x10c] sm:$0xf]
  %v2157 = vld [vmem:[%s7 + $0x110] sm:$0xf]
  %v2158 = vld [vmem:[%s7 + $0x114] sm:$0xf]
  %v2159 = vld [vmem:[%s7 + $0x118] sm:$0xf]
  %v2160 = vld [vmem:[%s7 + $0x11c] sm:$0xf]
  %v2161 = vld [vmem:[%s7 + $0x120] sm:$0xf]
  %v2162 = vld [vmem:[%s7 + $0x124] sm:$0xf]
  %v2163 = vld [vmem:[%s7 + $0x128] sm:$0xf]
  %v2164 = vld [vmem:[%s7 + $0x12c] sm:$0xf]
  %v2165 = vld [vmem:[%s7 + $0x130] sm:$0xf]
  %v2166 = vld [vmem:[%s7 + $0x134] sm:$0xf]
  %v2167 = vld [vmem:[%s7 + $0x138] sm:$0xf]
  %v2168 = vld [vmem:[%s7 + $0x13c] sm:$0xf]
  %v2169 = vld [vmem:[%s8] sm:$0x1]
  %v2171 = vlaneseq
  %v2172 = vshrl.u32 %v2171, 7
  %v2173 = vsub.s32 0, %v2172
  %v2174 = vrot.slane %v2169, %v2173
  %v2179 = vunpack.c.l.b16 %v2086
  %v2180 = vunpack.c.h.b16 %v2086
  %v2181 = vunpack.c.l.b16 %v2087
  %v2182 = vunpack.c.h.b16 %v2087
  %v2183 = vunpack.c.l.b16 %v2088
  %v2184 = vpack.c.b16 %v2179, %v2179
  %v2185 = vpack.c.b16 %v2180, %v2180
  %v2186 = vpack.c.b16 %v2181, %v2181
  %v2187 = vpack.c.b16 %v2182, %v2182
  %v2188 = vpack.c.b16 %v2183, %v2183
  %v2274 = vunpack.c.l.b16 %v2089
  %v2275 = vunpack.c.l.b16 %v2090
  %v2276 = vunpack.c.l.b16 %v2091
  %v2277 = vunpack.c.l.b16 %v2092
  %v2278 = vunpack.c.l.b16 %v2093
  %v2279 = vunpack.c.l.b16 %v2094
  %v2280 = vunpack.c.l.b16 %v2095
  %v2281 = vunpack.c.l.b16 %v2096
  %v2282 = vunpack.c.l.b16 %v2097
  %v2283 = vunpack.c.l.b16 %v2098
  %v2284 = vunpack.c.l.b16 %v2099
  %v2285 = vunpack.c.l.b16 %v2100
  %v2286 = vunpack.c.l.b16 %v2101
  %v2287 = vunpack.c.l.b16 %v2102
  %v2288 = vunpack.c.l.b16 %v2103
  %v2289 = vunpack.c.l.b16 %v2104
  %v2290 = vunpack.c.l.b16 %v2105
  %v2291 = vunpack.c.l.b16 %v2106
  %v2292 = vunpack.c.l.b16 %v2107
  %v2293 = vunpack.c.l.b16 %v2108
  %v2294 = vunpack.c.l.b16 %v2109
  %v2295 = vunpack.c.l.b16 %v2110
  %v2296 = vunpack.c.l.b16 %v2111
  %v2297 = vunpack.c.l.b16 %v2112
  %v2298 = vunpack.c.l.b16 %v2113
  %v2299 = vunpack.c.l.b16 %v2114
  %v2300 = vunpack.c.l.b16 %v2115
  %v2301 = vunpack.c.l.b16 %v2116
  %v2302 = vunpack.c.l.b16 %v2117
  %v2303 = vunpack.c.l.b16 %v2118
  %v2304 = vunpack.c.l.b16 %v2119
  %v2305 = vunpack.c.l.b16 %v2120
  %v2306 = vunpack.c.l.b16 %v2121
  %v2307 = vunpack.c.l.b16 %v2122
  %v2308 = vunpack.c.l.b16 %v2123
  %v2309 = vunpack.c.l.b16 %v2124
  %v2310 = vunpack.c.l.b16 %v2125
  %v2311 = vunpack.c.l.b16 %v2126
  %v2312 = vunpack.c.l.b16 %v2127
  %v2313 = vunpack.c.l.b16 %v2128
  %v2314 = vunpack.c.l.b16 %v2129
  %v2315 = vunpack.c.l.b16 %v2130
  %v2316 = vunpack.c.l.b16 %v2131
  %v2317 = vunpack.c.l.b16 %v2132
  %v2318 = vunpack.c.l.b16 %v2133
  %v2319 = vunpack.c.l.b16 %v2134
  %v2320 = vunpack.c.l.b16 %v2135
  %v2321 = vunpack.c.l.b16 %v2136
  %v2322 = vunpack.c.l.b16 %v2137
  %v2323 = vunpack.c.l.b16 %v2138
  %v2324 = vunpack.c.l.b16 %v2139
  %v2325 = vunpack.c.l.b16 %v2140
  %v2326 = vunpack.c.l.b16 %v2141
  %v2327 = vunpack.c.l.b16 %v2142
  %v2328 = vunpack.c.l.b16 %v2143
  %v2329 = vunpack.c.l.b16 %v2144
  %v2330 = vunpack.c.l.b16 %v2145
  %v2331 = vunpack.c.l.b16 %v2146
  %v2332 = vunpack.c.l.b16 %v2147
  %v2333 = vunpack.c.l.b16 %v2148
  %v2334 = vunpack.c.l.b16 %v2149
  %v2335 = vunpack.c.l.b16 %v2150
  %v2336 = vunpack.c.l.b16 %v2151
  %v2337 = vunpack.c.l.b16 %v2152
  %v2338 = vunpack.c.l.b16 %v2153
  %v2339 = vunpack.c.l.b16 %v2154
  %v2340 = vunpack.c.l.b16 %v2155
  %v2341 = vunpack.c.l.b16 %v2156
  %v2342 = vunpack.c.l.b16 %v2157
  %v2343 = vunpack.c.l.b16 %v2158
  %v2344 = vunpack.c.l.b16 %v2159
  %v2345 = vunpack.c.l.b16 %v2160
  %v2346 = vunpack.c.l.b16 %v2161
  %v2347 = vunpack.c.l.b16 %v2162
  %v2348 = vunpack.c.l.b16 %v2163
  %v2349 = vunpack.c.l.b16 %v2164
  %v2350 = vunpack.c.l.b16 %v2165
  %v2351 = vunpack.c.l.b16 %v2166
  %v2352 = vunpack.c.l.b16 %v2167
  %v2353 = vunpack.c.l.b16 %v2168
  %v2354 = vpack.c.b16 %v2275, %v2274
  %v2355 = vpack.c.b16 %v2277, %v2276
  %v2356 = vpack.c.b16 %v2279, %v2278
  %v2357 = vpack.c.b16 %v2281, %v2280
  %v2358 = vpack.c.b16 %v2283, %v2282
  %v2359 = vpack.c.b16 %v2285, %v2284
  %v2360 = vpack.c.b16 %v2287, %v2286
  %v2361 = vpack.c.b16 %v2289, %v2288
  %v2362 = vpack.c.b16 %v2291, %v2290
  %v2363 = vpack.c.b16 %v2293, %v2292
  %v2364 = vpack.c.b16 %v2295, %v2294
  %v2365 = vpack.c.b16 %v2297, %v2296
  %v2366 = vpack.c.b16 %v2299, %v2298
  %v2367 = vpack.c.b16 %v2301, %v2300
  %v2368 = vpack.c.b16 %v2303, %v2302
  %v2369 = vpack.c.b16 %v2305, %v2304
  %v2370 = vpack.c.b16 %v2307, %v2306
  %v2371 = vpack.c.b16 %v2309, %v2308
  %v2372 = vpack.c.b16 %v2311, %v2310
  %v2373 = vpack.c.b16 %v2313, %v2312
  %v2374 = vpack.c.b16 %v2315, %v2314
  %v2375 = vpack.c.b16 %v2317, %v2316
  %v2376 = vpack.c.b16 %v2319, %v2318
  %v2377 = vpack.c.b16 %v2321, %v2320
  %v2378 = vpack.c.b16 %v2323, %v2322
  %v2379 = vpack.c.b16 %v2325, %v2324
  %v2380 = vpack.c.b16 %v2327, %v2326
  %v2381 = vpack.c.b16 %v2329, %v2328
  %v2382 = vpack.c.b16 %v2331, %v2330
  %v2383 = vpack.c.b16 %v2333, %v2332
  %v2384 = vpack.c.b16 %v2335, %v2334
  %v2385 = vpack.c.b16 %v2337, %v2336
  %v2386 = vpack.c.b16 %v2339, %v2338
  %v2387 = vpack.c.b16 %v2341, %v2340
  %v2388 = vpack.c.b16 %v2343, %v2342
  %v2389 = vpack.c.b16 %v2345, %v2344
  %v2390 = vpack.c.b16 %v2347, %v2346
  %v2391 = vpack.c.b16 %v2349, %v2348
  %v2392 = vpack.c.b16 %v2351, %v2350
  %v2393 = vpack.c.b16 %v2353, %v2352
  %2434 = vmatprep.subr.bf16.mxu0 0
  %2435 = vmatpush1.bf16.msra.mxu0 %v2361
  %2436 = vmatprep.subr.bf16.mxu0 0
  %2437 = vmatpush1.bf16.msra.mxu0 %v2360
  %2438 = vmatprep.subr.bf16.mxu0 0
  %2439 = vmatpush1.bf16.msra.mxu0 %v2359
  %2440 = vmatprep.subr.bf16.mxu0 0
  %2441 = vmatpush1.bf16.msra.mxu0 %v2358
  %2442 = vmatprep.subr.bf16.mxu0 0
  %2443 = vmatpush1.bf16.msra.mxu0 %v2357
  %2444 = vmatprep.subr.bf16.mxu0 0
  %2445 = vmatpush1.bf16.msra.mxu0 %v2356
  %2446 = vmatprep.subr.bf16.mxu0 0
  %2447 = vmatpush1.bf16.msra.mxu0 %v2355
  %2448 = vmatprep.subr.bf16.mxu0 0
  %2449 = vmatpush1.bf16.msra.mxu0 %v2354
  %2450 = vmatprep.subr.bf16.mxu0 0
  %2451 = vmatpush2.bf16.msra.mxu0 %v2369
  %2452 = vmatprep.subr.bf16.mxu0 0
  %2453 = vmatpush2.bf16.msra.mxu0 %v2368
  %2454 = vmatprep.subr.bf16.mxu0 0
  %2455 = vmatpush2.bf16.msra.mxu0 %v2367
  %2456 = vmatprep.subr.bf16.mxu0 0
  %2457 = vmatpush2.bf16.msra.mxu0 %v2366
  %2458 = vmatprep.subr.bf16.mxu0 0
  %2459 = vmatpush2.bf16.msra.mxu0 %v2365
  %2460 = vmatprep.subr.bf16.mxu0 0
  %2461 = vmatpush2.bf16.msra.mxu0 %v2364
  %2462 = vmatprep.subr.bf16.mxu0 0
  %2463 = vmatpush2.bf16.msra.mxu0 %v2363
  %2464 = vmatprep.subr.bf16.mxu0 0
  %2465 = vmatpush2.bf16.msra.mxu0 %v2362
  %2466 = vmatprep.mubr.bf16.mxu0 %v2185
  %2467 = vmatmul.mubr.bf16.gmra.mxu0 %v2184
  %v2468 = vpop.f32.mrf.mxu0
  %v2469 = vadd.f32 %v2174, %v2468
  %v2470 = vpop.f32.mrf.mxu0
  %v2471 = vpop.f32.mrf.mxu0
  %v2472 = vpop.f32.mrf.mxu0
  %2473 = vdwg.mxu0
  %2474 = vmatprep.subr.bf16.mxu0 0
  %2475 = vmatpush1.bf16.msra.mxu0 %v2377
  %2476 = vmatprep.subr.bf16.mxu0 0
  %2477 = vmatpush1.bf16.msra.mxu0 %v2376
  %2478 = vmatprep.subr.bf16.mxu0 0
  %2479 = vmatpush1.bf16.msra.mxu0 %v2375
  %2480 = vmatprep.subr.bf16.mxu0 0
  %2481 = vmatpush1.bf16.msra.mxu0 %v2374
  %2482 = vmatprep.subr.bf16.mxu0 0
  %2483 = vmatpush1.bf16.msra.mxu0 %v2373
  %2484 = vmatprep.subr.bf16.mxu0 0
  %2485 = vmatpush1.bf16.msra.mxu0 %v2372
  %2486 = vmatprep.subr.bf16.mxu0 0
  %2487 = vmatpush1.bf16.msra.mxu0 %v2371
  %2488 = vmatprep.subr.bf16.mxu0 0
  %2489 = vmatpush1.bf16.msra.mxu0 %v2370
  %2490 = vmatprep.subr.bf16.mxu0 0
  %2491 = vmatpush2.bf16.msra.mxu0 %v2385
  %2492 = vmatprep.subr.bf16.mxu0 0
  %2493 = vmatpush2.bf16.msra.mxu0 %v2384
  %2494 = vmatprep.subr.bf16.mxu0 0
  %2495 = vmatpush2.bf16.msra.mxu0 %v2383
  %2496 = vmatprep.subr.bf16.mxu0 0
  %2497 = vmatpush2.bf16.msra.mxu0 %v2382
  %2498 = vmatprep.subr.bf16.mxu0 0
  %2499 = vmatpush2.bf16.msra.mxu0 %v2381
  %2500 = vmatprep.subr.bf16.mxu0 0
  %2501 = vmatpush2.bf16.msra.mxu0 %v2380
  %2502 = vmatprep.subr.bf16.mxu0 0
  %2503 = vmatpush2.bf16.msra.mxu0 %v2379
  %2504 = vmatprep.subr.bf16.mxu0 0
  %2505 = vmatpush2.bf16.msra.mxu0 %v2378
  %2506 = vmatprep.mubr.bf16.mxu0 %v2187
  %2507 = vmatmul.mubr.bf16.gmra.mxu0 %v2186
  %v2508 = vpop.f32.mrf.mxu0
  %v2509 = vadd.f32 %v2469, %v2508
  %v2510 = vpop.f32.mrf.mxu0
  %v2511 = vpop.f32.mrf.mxu0
  %v2512 = vpop.f32.mrf.mxu0
  %2513 = vdwg.mxu0
  %2514 = vmatprep.subr.bf16.mxu0 0
  %2515 = vmatpush1.bf16.msra.mxu0 %v2393
  %2516 = vmatprep.subr.bf16.mxu0 0
  %2517 = vmatpush1.bf16.msra.mxu0 %v2392
  %2518 = vmatprep.subr.bf16.mxu0 0
  %2519 = vmatpush1.bf16.msra.mxu0 %v2391
  %2520 = vmatprep.subr.bf16.mxu0 0
  %2521 = vmatpush1.bf16.msra.mxu0 %v2390
  %2522 = vmatprep.subr.bf16.mxu0 0
  %2523 = vmatpush1.bf16.msra.mxu0 %v2389
  %2524 = vmatprep.subr.bf16.mxu0 0
  %2525 = vmatpush1.bf16.msra.mxu0 %v2388
  %2526 = vmatprep.subr.bf16.mxu0 0
  %2527 = vmatpush1.bf16.msra.mxu0 %v2387
  %2528 = vmatprep.subr.bf16.mxu0 0
  %2529 = vmatpush1.bf16.msra.mxu0 %v2386
  %2530 = vmatprep.subr.bf16.mxu0 0
  %2531 = vmatpush2.bf16.msra.mxu0 0
  %2532 = vmatprep.subr.bf16.mxu0 0
  %2533 = vmatpush2.bf16.msra.mxu0 0
  %2534 = vmatprep.subr.bf16.mxu0 0
  %2535 = vmatpush2.bf16.msra.mxu0 0
  %2536 = vmatprep.subr.bf16.mxu0 0
  %2537 = vmatpush2.bf16.msra.mxu0 0
  %2538 = vmatprep.subr.bf16.mxu0 0
  %2539 = vmatpush2.bf16.msra.mxu0 0
  %2540 = vmatprep.subr.bf16.mxu0 0
  %2541 = vmatpush2.bf16.msra.mxu0 0
  %2542 = vmatprep.subr.bf16.mxu0 0
  %2543 = vmatpush2.bf16.msra.mxu0 0
  %2544 = vmatprep.subr.bf16.mxu0 0
  %2545 = vmatpush2.bf16.msra.mxu0 0
  %2546 = vmatprep.mubr.bf16.mxu0 0
  %2547 = vmatmul.mubr.bf16.gmra.mxu0 %v2188
  %v2548 = vpop.f32.mrf.mxu0
  %v2549 = vadd.f32 %v2509, %v2548
  %v2550 = vpop.f32.mrf.mxu0
  %v2551 = vpop.f32.mrf.mxu0
  %v2552 = vpop.f32.mrf.mxu0
  %2553 = vdwg.mxu0
  %v2554 = vtanh.pop %v2549
  %v2555 = vpack.c.bf16 %v2554, %v2554
  %v2556 = vld [vmem:[%s9] sm:$0xf]
  %v2557 = vld [vmem:[%s9 + $0x4] sm:$0xf]
  %v2558 = vld [vmem:[%s9 + $0x8] sm:$0xf]
  %v2559 = vld [vmem:[%s9 + $0xc] sm:$0xf]
  %v2560 = vld [vmem:[%s9 + $0x10] sm:$0xf]
  %v2561 = vld [vmem:[%s9 + $0x14] sm:$0xf]
  %v2562 = vld [vmem:[%s9 + $0x18] sm:$0xf]
  %v2563 = vld [vmem:[%s9 + $0x1c] sm:$0xf]
  %v2564 = vld [vmem:[%s9 + $0x20] sm:$0xf]
  %v2565 = vld [vmem:[%s9 + $0x24] sm:$0xf]
  %v2566 = vld [vmem:[%s9 + $0x28] sm:$0xf]
  %v2567 = vld [vmem:[%s9 + $0x2c] sm:$0xf]
  %v2568 = vld [vmem:[%s9 + $0x30] sm:$0xf]
  %v2569 = vld [vmem:[%s9 + $0x34] sm:$0xf]
  %v2570 = vld [vmem:[%s9 + $0x38] sm:$0xf]
  %v2571 = vld [vmem:[%s10] sm:$0x1]
  %v2573 = vlaneseq
  %v2574 = vshrl.u32 %v2573, 7
  %v2575 = vsub.s32 0, %v2574
  %v2576 = vrot.slane %v2571, %v2575
  %v2593 = vunpack.c.l.b16 %v2556
  %v2594 = vunpack.c.l.b16 %v2557
  %v2595 = vunpack.c.l.b16 %v2558
  %v2596 = vunpack.c.l.b16 %v2559
  %v2597 = vunpack.c.l.b16 %v2560
  %v2598 = vunpack.c.l.b16 %v2561
  %v2599 = vunpack.c.l.b16 %v2562
  %v2600 = vunpack.c.l.b16 %v2563
  %v2601 = vunpack.c.l.b16 %v2564
  %v2602 = vunpack.c.l.b16 %v2565
  %v2603 = vunpack.c.l.b16 %v2566
  %v2604 = vunpack.c.l.b16 %v2567
  %v2605 = vunpack.c.l.b16 %v2568
  %v2606 = vunpack.c.l.b16 %v2569
  %v2607 = vunpack.c.l.b16 %v2570
  %v2608 = vpack.c.b16 %v2594, %v2593
  %v2609 = vpack.c.b16 %v2596, %v2595
  %v2610 = vpack.c.b16 %v2598, %v2597
  %v2611 = vpack.c.b16 %v2600, %v2599
  %v2612 = vpack.c.b16 %v2602, %v2601
  %v2613 = vpack.c.b16 %v2604, %v2603
  %v2614 = vpack.c.b16 %v2606, %v2605
  %v2615 = vpack.c.b16 %v2607, %v2607
  %vm2623 = vcmask 982016
  %v2625 = vsel %vm2623, %v2555, 0
  %v2628 = vsel %vm779, %v2615, 0
  %2630 = vmatprep.subr.bf16.mxu0 0
  %2631 = vmatpush1.bf16.msra.mxu0 %v2628
  %2632 = vmatprep.subr.bf16.mxu0 0
  %2633 = vmatpush1.bf16.msra.mxu0 %v2614
  %2634 = vmatprep.subr.bf16.mxu0 0
  %2635 = vmatpush1.bf16.msra.mxu0 %v2613
  %2636 = vmatprep.subr.bf16.mxu0 0
  %2637 = vmatpush1.bf16.msra.mxu0 %v2612
  %2638 = vmatprep.subr.bf16.mxu0 0
  %2639 = vmatpush1.bf16.msra.mxu0 %v2611
  %2640 = vmatprep.subr.bf16.mxu0 0
  %2641 = vmatpush1.bf16.msra.mxu0 %v2610
  %2642 = vmatprep.subr.bf16.mxu0 0
  %2643 = vmatpush1.bf16.msra.mxu0 %v2609
  %2644 = vmatprep.subr.bf16.mxu0 0
  %2645 = vmatpush1.bf16.msra.mxu0 %v2608
  %2646 = vmatprep.subr.bf16.mxu0 0
  %2647 = vmatpush2.bf16.msra.mxu0 0
  %2648 = vmatprep.subr.bf16.mxu0 0
  %2649 = vmatpush2.bf16.msra.mxu0 0
  %2650 = vmatprep.subr.bf16.mxu0 0
  %2651 = vmatpush2.bf16.msra.mxu0 0
  %2652 = vmatprep.subr.bf16.mxu0 0
  %2653 = vmatpush2.bf16.msra.mxu0 0
  %2654 = vmatprep.subr.bf16.mxu0 0
  %2655 = vmatpush2.bf16.msra.mxu0 0
  %2656 = vmatprep.subr.bf16.mxu0 0
  %2657 = vmatpush2.bf16.msra.mxu0 0
  %2658 = vmatprep.subr.bf16.mxu0 0
  %2659 = vmatpush2.bf16.msra.mxu0 0
  %2660 = vmatprep.subr.bf16.mxu0 0
  %2661 = vmatpush2.bf16.msra.mxu0 0
  %2662 = vmatprep.mubr.bf16.mxu0 0
  %2663 = vmatmul.mubr.bf16.gmra.mxu0 %v2625
  %v2664 = vpop.f32.mrf.mxu0
  %v2665 = vadd.f32 %v2576, %v2664
  %v2666 = vpop.f32.mrf.mxu0
  %v2667 = vpop.f32.mrf.mxu0
  %v2668 = vpop.f32.mrf.mxu0
  %2669 = vdwg.mxu0
  %v2670 = vtanh.pop %v2665
  %v2671 = vpack.c.bf16 %v2670, %v2670
  %v2672 = vld [vmem:[%s11] sm:$0xf]
  %v2673 = vld [vmem:[%s11 + $0x4] sm:$0xf]
  %v2674 = vld [vmem:[%s11 + $0x8] sm:$0xf]
  %v2675 = vld [vmem:[%s11 + $0xc] sm:$0xf]
  %v2676 = vld [vmem:[%s11 + $0x10] sm:$0xf]
  %v2677 = vld [vmem:[%s11 + $0x14] sm:$0xf]
  %v2678 = vld [vmem:[%s11 + $0x18] sm:$0xf]
  %v2679 = vld [vmem:[%s11 + $0x1c] sm:$0xf]
  %v2680 = vld [vmem:[%s11 + $0x20] sm:$0xf]
  %v2681 = vld [vmem:[%s11 + $0x24] sm:$0xf]
  %v2682 = vld [vmem:[%s11 + $0x28] sm:$0x3]
  %v2683 = vld [vmem:[%s12] sm:$0x1]
  %v2685 = vlaneseq
  %v2686 = vshrl.u32 %v2685, 7
  %v2687 = vsub.s32 0, %v2686
  %v2688 = vrot.slane %v2683, %v2687
  %v2701 = vunpack.c.l.b16 %v2672
  %v2702 = vunpack.c.l.b16 %v2673
  %v2703 = vunpack.c.l.b16 %v2674
  %v2704 = vunpack.c.l.b16 %v2675
  %v2705 = vunpack.c.l.b16 %v2676
  %v2706 = vunpack.c.l.b16 %v2677
  %v2707 = vunpack.c.l.b16 %v2678
  %v2708 = vunpack.c.l.b16 %v2679
  %v2709 = vunpack.c.l.b16 %v2680
  %v2710 = vunpack.c.l.b16 %v2681
  %v2711 = vunpack.c.l.b16 %v2682
  %v2712 = vpack.c.b16 %v2702, %v2701
  %v2713 = vpack.c.b16 %v2704, %v2703
  %v2714 = vpack.c.b16 %v2706, %v2705
  %v2715 = vpack.c.b16 %v2708, %v2707
  %v2716 = vpack.c.b16 %v2710, %v2709
  %v2717 = vpack.c.b16 %v2711, %v2711
  %vm2723 = vcmask 687104
  %v2725 = vsel %vm2723, %v2671, 0
  %vm2727 = vcmask 1041408
  %v2729 = vsel %vm2727, %v2717, 0
  %2731 = vmatprep.subr.bf16.mxu0 0
  %2732 = vmatpush1.bf16.msra.mxu0 0
  %2733 = vmatprep.subr.bf16.mxu0 0
  %2734 = vmatpush1.bf16.msra.mxu0 0
  %2735 = vmatprep.subr.bf16.mxu0 0
  %2736 = vmatpush1.bf16.msra.mxu0 %v2729
  %2737 = vmatprep.subr.bf16.mxu0 0
  %2738 = vmatpush1.bf16.msra.mxu0 %v2716
  %2739 = vmatprep.subr.bf16.mxu0 0
  %2740 = vmatpush1.bf16.msra.mxu0 %v2715
  %2741 = vmatprep.subr.bf16.mxu0 0
  %2742 = vmatpush1.bf16.msra.mxu0 %v2714
  %2743 = vmatprep.subr.bf16.mxu0 0
  %2744 = vmatpush1.bf16.msra.mxu0 %v2713
  %2745 = vmatprep.subr.bf16.mxu0 0
  %2746 = vmatpush1.bf16.msra.mxu0 %v2712
  %2747 = vmatprep.subr.bf16.mxu0 0
  %2748 = vmatpush2.bf16.msra.mxu0 0
  %2749 = vmatprep.subr.bf16.mxu0 0
  %2750 = vmatpush2.bf16.msra.mxu0 0
  %2751 = vmatprep.subr.bf16.mxu0 0
  %2752 = vmatpush2.bf16.msra.mxu0 0
  %2753 = vmatprep.subr.bf16.mxu0 0
  %2754 = vmatpush2.bf16.msra.mxu0 0
  %2755 = vmatprep.subr.bf16.mxu0 0
  %2756 = vmatpush2.bf16.msra.mxu0 0
  %2757 = vmatprep.subr.bf16.mxu0 0
  %2758 = vmatpush2.bf16.msra.mxu0 0
  %2759 = vmatprep.subr.bf16.mxu0 0
  %2760 = vmatpush2.bf16.msra.mxu0 0
  %2761 = vmatprep.subr.bf16.mxu0 0
  %2762 = vmatpush2.bf16.msra.mxu0 0
  %2763 = vmatprep.mubr.bf16.mxu0 0
  %2764 = vmatmul.mubr.bf16.gmra.mxu0 %v2725
  %v2765 = vpop.f32.mrf.mxu0
  %v2766 = vadd.f32 %v2688, %v2765
  %v2767 = vpop.f32.mrf.mxu0
  %v2768 = vpop.f32.mrf.mxu0
  %v2769 = vpop.f32.mrf.mxu0
  %2770 = vdwg.mxu0
  %2771 = vst [vmem:[%s13] sm:$0xff] %v2766
  // Predicated region
  $region54: #{lenet5_forward.1} parent=0 // pred_check
    _
  $region55: #{lenet5_forward.1} parent=0 // pred_check_branch
    %2773 = sbr.rel (0) target = $region57
  $region56: #{lenet5_forward.1} parent=0 // pred_region
    _
  $region57: #{lenet5_forward.1} parent=0 // pred_fallthru
    _
  // Predicated region
  $region58: #{lenet5_forward.1} parent=0 // pred_check
    _
  $region59: #{lenet5_forward.1} parent=0 // pred_check_branch
    %2775 = sbr.rel (0) target = $region61
  $region60: #{lenet5_forward.1} parent=0 // pred_region
    _
  $region61: #{lenet5_forward.1} parent=0 // pred_fallthru
    _

</llo_original>
